<compile_context>
chip_gen: v7x
topology: tpu7x:2x2x1
jax: 0.10.0
libtpu: 0.0.40
codegen_flags: <defaults>
</compile_context>

<pallas_src>
import functools
import math

import jax
import jax.numpy as jnp
from jax.experimental import pallas as pl
from jax.experimental.pallas import tpu as pltpu


# ------------------------------- the kernel -------------------------------

def _erf_approx(x):
    # Abramowitz & Stegun 7.1.26, max abs error ~1.5e-7.  Uses only exp/abs/select,
    # which always lower in Mosaic.
    s = jnp.where(x < 0.0, -1.0, 1.0)
    a = jnp.abs(x)
    t = 1.0 / (1.0 + 0.3275911 * a)
    poly = t * (0.254829592
                + t * (-0.284496736
                       + t * (1.421413741
                              + t * (-1.453152027 + t * 1.061405429))))
    return s * (1.0 - poly * jnp.exp(-a * a))


def _pair_embed_kernel(nlayers, eps, x_ref, idx_ref, *refs):
    out_ref = refs[-1]
    prm = refs[:-1]                      # 4 refs per layer: bn_scale, bn_shift, conv_w, conv_b

    xb = x_ref[0]                        # (5, S): [px, py, pz, E, phi]
    S = xb.shape[-1]
    P = S * S

    px, py, pz, e, phi = (xb[c:c + 1, :] for c in range(5))          # each (1, S)
    pt = jnp.sqrt(px * px + py * py)
    rap = 0.5 * jnp.log(1.0 + 2.0 * pz / jnp.maximum(e - pz, 1e-20))

    feat = jnp.concatenate([px, py, pz, e, pt, rap, phi], axis=0)    # (7, S)

    # Pair expansion: one-hot selection matrices (S, P) from the static pair-index table;
    # small MXU matmuls expand per-particle rows to per-pair rows (7, P).
    a_idx = idx_ref[0:1, :]              # (1, P) int32 : first  particle of pair p
    b_idx = idx_ref[1:2, :]              # (1, P) int32 : second particle of pair p
    kk = jax.lax.broadcasted_iota(jnp.int32, (S, P), 0)
    sel_a = (kk == a_idx).astype(jnp.float32)
    sel_b = (kk == b_idx).astype(jnp.float32)

    # hi/lo split keeps the one-hot gather exact regardless of internal matmul precision
    # (feat_hi is exactly representable in bf16; feat_lo is a tiny residual).
    feat_hi = feat.astype(jnp.bfloat16).astype(jnp.float32)
    feat_lo = feat - feat_hi

    def expand(sel):
        return (jnp.dot(feat_hi, sel, preferred_element_type=jnp.float32)
                + jnp.dot(feat_lo, sel, preferred_element_type=jnp.float32))

    fi = expand(sel_a)                   # (7, P)
    fj = expand(sel_b)                   # (7, P)

    pxi, pyi, pzi, ei, pti, rapi, phii = (fi[c:c + 1, :] for c in range(7))
    pxj, pyj, pzj, ej, ptj, rapj, phij = (fj[c:c + 1, :] for c in range(7))

    # pairwise_lv_fts (num_outputs=4)
    two_pi = 2.0 * math.pi
    d = phii - phij + math.pi
    dphi = d - two_pi * jnp.floor(d / two_pi) - math.pi              # (a-b+pi) mod 2pi - pi
    drap = rapi - rapj
    delta = jnp.sqrt(drap * drap + dphi * dphi)

    lndelta = jnp.log(jnp.maximum(delta, eps) + 1.0)
    ptmin = jnp.minimum(pti, ptj)
    lnkt = jnp.log(jnp.maximum(ptmin * delta, eps) + 1.0)
    lnz = jnp.log(jnp.maximum(ptmin / jnp.maximum(pti + ptj, eps), eps) + 1.0)
    pxs = pxi + pxj
    pys = pyi + pyj
    pzs = pzi + pzj
    es = ei + ej
    m2 = jnp.maximum(es * es - (pxs * pxs + pys * pys + pzs * pzs), eps)
    lnm2 = jnp.log(m2 + 1.0)

    pair_mask = ((pti != 0.0) & (ptj != 0.0)).astype(jnp.float32)    # (1, P)
    h = jnp.concatenate([lnkt, lnz, lndelta, lnm2], axis=0) * pair_mask   # (4, P)

    # embed: [BatchNorm1d(eval, folded) -> GELU(erf) -> Conv1d(k=1)] per layer
    inv_sqrt2 = 1.0 / math.sqrt(2.0)
    for l in range(nlayers):
        scale_ref, shift_ref, w_ref, b_ref = prm[4 * l: 4 * l + 4]
        z = h * scale_ref[...] + shift_ref[...]                      # per-channel scale/shift
        z = 0.5 * z * (1.0 + _erf_approx(z * inv_sqrt2))             # GELU (exact-erf approx)
        h = jnp.dot(w_ref[...], z, preferred_element_type=jnp.float32) + b_ref[...]

    # the torch module scatters only off-diagonal pairs; the diagonal of y stays zero.
    offdiag = (a_idx != b_idx).astype(jnp.float32)                   # (1, P)
    out_ref[0] = (h * offdiag).astype(out_ref.dtype)


# ------------------------------- wrapper -----------------------------------

def pair_embed(x, params):
    """x: (B, 4, S) particle 4-momenta (px, py, pz, E). Returns (B, out_dim, S, S)."""
    B, C, S = x.shape
    assert C == 4
    P = S * S
    nlayers = len(params)
    out_dim = params[-1]['w'].shape[0]

    # TODO(synk): atan2 has no guaranteed Mosaic lowering, so the per-particle phi (O(B*S))
    # is computed here; all O(S^2) pairwise work happens inside the kernel.
    phi = jnp.arctan2(x[:, 1], x[:, 0])                                       # (B, S)
    x5 = jnp.concatenate([x, phi[:, None, :]], axis=1).astype(jnp.float32)    # (B, 5, S)

    ar = jnp.arange(S, dtype=jnp.int32)
    pair_idx = jnp.stack([jnp.repeat(ar, S), jnp.tile(ar, S)], axis=0)        # (2, P) int32

    # fold eval-mode BatchNorm into per-channel scale/shift; conv weights squeezed to (C_out, C_in)
    flat_params = []
    for p in params:
        scale = p['bn_gamma'] / jnp.sqrt(p['bn_var'] + 1e-5)
        shift = p['bn_beta'] - p['bn_mean'] * scale
        flat_params += [scale[:, None], shift[:, None], p['w'], p['b'][:, None]]

    def const_spec(a):
        nd = a.ndim
        return pl.BlockSpec(a.shape, lambda b, _nd=nd: (0,) * _nd)

    in_specs = [pl.BlockSpec((1, 5, S), lambda b: (b, 0, 0)),
                const_spec(pair_idx)] + [const_spec(w) for w in flat_params]

    out = pl.pallas_call(
        functools.partial(_pair_embed_kernel, nlayers, 1e-8),
        out_shape=jax.ShapeDtypeStruct((B, out_dim, P), jnp.float32),
        grid=(B,),
        in_specs=in_specs,
        out_specs=pl.BlockSpec((1, out_dim, P), lambda b: (b, 0, 0)),
        compiler_params=pltpu.CompilerParams(dimension_semantics=("parallel",)),
    )(x5, pair_idx, *flat_params)

    # (B, out_dim, S*S) -> (B, out_dim, S, S): pure metadata reshape, pairs are row-major (i, j).
    return out.reshape(B, out_dim, S, S)


# --------------------------- pure-JAX reference -----------------------------

def _ref_pairwise_lv_fts(xi, xj, eps=1e-8):
    def ptrapphi(p4):
        px, py, pz, e = p4[:, 0:1], p4[:, 1:2], p4[:, 2:3], p4[:, 3:4]
        pt = jnp.sqrt(px ** 2 + py ** 2)
        rap = 0.5 * jnp.log(1.0 + 2.0 * pz / jnp.maximum(e - pz, 1e-20))
        phi = jnp.arctan2(py, px)
        return pt, rap, phi

    pti, rapi, phii = ptrapphi(xi)
    ptj, rapj, phij = ptrapphi(xj)
    mask = (pti != 0).astype(jnp.float32) * (ptj != 0).astype(jnp.float32)
    dphi = jnp.mod(phii - phij + math.pi, 2.0 * math.pi) - math.pi
    delta = jnp.sqrt((rapi - rapj) ** 2 + dphi ** 2)
    lndelta = jnp.log(jnp.maximum(delta, eps) + 1.0)
    ptmin = jnp.minimum(pti, ptj)
    lnkt = jnp.log(jnp.maximum(ptmin * delta, eps) + 1.0)
    lnz = jnp.log(jnp.maximum(ptmin / jnp.maximum(pti + ptj, eps), eps) + 1.0)
    x4 = xi + xj
    m2 = jnp.maximum(x4[:, 3:4] ** 2 - (x4[:, 0:1] ** 2 + x4[:, 1:2] ** 2 + x4[:, 2:3] ** 2), eps)
    lnm2 = jnp.log(m2 + 1.0)
    return jnp.concatenate([lnkt, lnz, lndelta, lnm2], axis=1) * mask


def reference(x, params, eps=1e-8):
    B, _, S = x.shape
    i, j = jnp.tril_indices(S, k=-1)
    xi = x[:, :, i]                       # (B, 4, Np)
    xj = x[:, :, j]
    h = _ref_pairwise_lv_fts(xi, xj, eps)
    for p in params:
        z = (h - p['bn_mean'][None, :, None]) / jnp.sqrt(p['bn_var'][None, :, None] + 1e-5)
        z = z * p['bn_gamma'][None, :, None] + p['bn_beta'][None, :, None]
        z = 0.5 * z * (1.0 + jax.lax.erf(z * (1.0 / math.sqrt(2.0))))
        h = jnp.einsum('oc,bcp->bop', p['w'], z, precision='highest') + p['b'][None, :, None]
    out_dim = params[-1]['w'].shape[0]
    y = jnp.zeros((B, out_dim, S, S), jnp.float32)
    y = y.at[:, :, i, j].set(h)
    y = y.at[:, :, j, i].set(h)
    return y


# ----------------------------- parameter init -------------------------------

def init_params(key, input_dim, dims):
    params = []
    c_in = input_dim
    for dim in dims:
        key, k1, k2, k3, k4, k5, k6 = jax.random.split(key, 7)
        bound = 1.0 / math.sqrt(c_in)
        params.append({
            'bn_gamma': jax.random.uniform(k1, (c_in,), jnp.float32, 0.5, 1.5),
            'bn_beta':  jax.random.uniform(k2, (c_in,), jnp.float32, -0.5, 0.5),
            'bn_mean':  jax.random.uniform(k3, (c_in,), jnp.float32, -0.5, 0.5),
            'bn_var':   jax.random.uniform(k4, (c_in,), jnp.float32, 0.5, 1.5),
            'w':        jax.random.uniform(k5, (dim, c_in), jnp.float32, -bound, bound),
            'b':        jax.random.uniform(k6, (dim,), jnp.float32, -bound, bound),
        })
        c_in = dim
    return params


# ---------------------------------- main ------------------------------------

if __name__ == "__main__":
    B, S = 2, 16
    dims = (32, 32, 8)           # PairEmbed embed dims; out_dim = 8

    key = jax.random.PRNGKey(0)
    kp, kv, km = jax.random.split(key, 3)

    # physical 4-vectors (E >= |p|) so rapidity stays finite, with some zero-padded particles
    p3 = jax.random.normal(kv, (B, 3, S), jnp.float32)
    m = jnp.abs(jax.random.normal(km, (B, 1, S), jnp.float32)) * 0.2
    e = jnp.sqrt(jnp.sum(p3 ** 2, axis=1, keepdims=True) + m ** 2)
    x = jnp.concatenate([p3, e], axis=1)                                   # (B, 4, S)
    valid = (jnp.arange(S)[None, :] < jnp.array([S, 11])[:, None]).astype(jnp.float32)
    x = x * valid[:, None, :]                                              # zero-pad 2nd jet

    params = init_params(kp, 4, dims)

    y = pair_embed(x, params)
    y = jax.block_until_ready(y)

    y_ref = reference(x, params)
    assert y.shape == (B, dims[-1], S, S)
    max_err = float(jnp.max(jnp.abs(y - y_ref)))
    assert bool(jnp.allclose(y, y_ref, atol=2e-2, rtol=2e-2)), f"max abs err = {max_err}"

    print("KERNEL_OK")
</pallas_src>

<mosaic_0001>
module attributes {stable_mosaic.version = 11 : i64} {
  func.func @_pair_embed_kernel(%arg0: i32, %arg1: memref<1x5x16xf32, #tpu.memory_space<vmem>>, %arg2: memref<2x256xi32, #tpu.memory_space<vmem>>, %arg3: memref<4x1xf32, #tpu.memory_space<vmem>>, %arg4: memref<4x1xf32, #tpu.memory_space<vmem>>, %arg5: memref<32x4xf32, #tpu.memory_space<vmem>>, %arg6: memref<32x1xf32, #tpu.memory_space<vmem>>, %arg7: memref<32x1xf32, #tpu.memory_space<vmem>>, %arg8: memref<32x1xf32, #tpu.memory_space<vmem>>, %arg9: memref<32x32xf32, #tpu.memory_space<vmem>>, %arg10: memref<32x1xf32, #tpu.memory_space<vmem>>, %arg11: memref<32x1xf32, #tpu.memory_space<vmem>>, %arg12: memref<32x1xf32, #tpu.memory_space<vmem>>, %arg13: memref<8x32xf32, #tpu.memory_space<vmem>>, %arg14: memref<8x1xf32, #tpu.memory_space<vmem>>, %arg15: memref<1x8x256xf32, #tpu.memory_space<vmem>>) attributes {dimension_semantics = [#tpu.dimension_semantics<parallel>], iteration_bounds = array<i64: 2>, scalar_prefetch = 0 : i64, scratch_operands = 0 : i64, tpu.core_type = #tpu.core_type<tc>, window_params = [{transform_indices = @transform_0, window_bounds = array<i64: 1, 5, 16>}, {pipeline_mode = #tpu.pipeline_mode<synchronous>, transform_indices = @transform_1, window_bounds = array<i64: 2, 256>}, {pipeline_mode = #tpu.pipeline_mode<synchronous>, transform_indices = @transform_2, window_bounds = array<i64: 4, 1>}, {pipeline_mode = #tpu.pipeline_mode<synchronous>, transform_indices = @transform_3, window_bounds = array<i64: 4, 1>}, {pipeline_mode = #tpu.pipeline_mode<synchronous>, transform_indices = @transform_4, window_bounds = array<i64: 32, 4>}, {pipeline_mode = #tpu.pipeline_mode<synchronous>, transform_indices = @transform_5, window_bounds = array<i64: 32, 1>}, {pipeline_mode = #tpu.pipeline_mode<synchronous>, transform_indices = @transform_6, window_bounds = array<i64: 32, 1>}, {pipeline_mode = #tpu.pipeline_mode<synchronous>, transform_indices = @transform_7, window_bounds = array<i64: 32, 1>}, {pipeline_mode = #tpu.pipeline_mode<synchronous>, transform_indices = @transform_8, window_bounds = array<i64: 32, 32>}, {pipeline_mode = #tpu.pipeline_mode<synchronous>, transform_indices = @transform_9, window_bounds = array<i64: 32, 1>}, {pipeline_mode = #tpu.pipeline_mode<synchronous>, transform_indices = @transform_10, window_bounds = array<i64: 32, 1>}, {pipeline_mode = #tpu.pipeline_mode<synchronous>, transform_indices = @transform_11, window_bounds = array<i64: 32, 1>}, {pipeline_mode = #tpu.pipeline_mode<synchronous>, transform_indices = @transform_12, window_bounds = array<i64: 8, 32>}, {pipeline_mode = #tpu.pipeline_mode<synchronous>, transform_indices = @transform_13, window_bounds = array<i64: 8, 1>}, {transform_indices = @transform_14, window_bounds = array<i64: 1, 8, 256>}]} {
    %c0 = arith.constant 0 : index
    %c0_0 = arith.constant 0 : index
    %c0_1 = arith.constant 0 : index
    %0 = vector.load %arg1[%c0, %c0_0, %c0_1] : memref<1x5x16xf32, #tpu.memory_space<vmem>>, vector<1x5x16xf32>
    %1 = vector.shape_cast %0 : vector<1x5x16xf32> to vector<5x16xf32>
    %2 = vector.extract_strided_slice %1 {offsets = [0, 0], sizes = [1, 16], strides = [1, 1]} : vector<5x16xf32> to vector<1x16xf32>
    %3 = vector.extract_strided_slice %1 {offsets = [1, 0], sizes = [1, 16], strides = [1, 1]} : vector<5x16xf32> to vector<1x16xf32>
    %4 = vector.extract_strided_slice %1 {offsets = [2, 0], sizes = [1, 16], strides = [1, 1]} : vector<5x16xf32> to vector<1x16xf32>
    %5 = vector.extract_strided_slice %1 {offsets = [3, 0], sizes = [1, 16], strides = [1, 1]} : vector<5x16xf32> to vector<1x16xf32>
    %6 = vector.extract_strided_slice %1 {offsets = [4, 0], sizes = [1, 16], strides = [1, 1]} : vector<5x16xf32> to vector<1x16xf32>
    %7 = arith.mulf %2, %2 : vector<1x16xf32>
    %8 = arith.mulf %3, %3 : vector<1x16xf32>
    %9 = arith.addf %7, %8 : vector<1x16xf32>
    %10 = math.sqrt %9 : vector<1x16xf32>
    %cst = arith.constant 2.000000e+00 : f32
    %11 = vector.broadcast %cst : f32 to vector<1x16xf32>
    %12 = arith.mulf %11, %4 : vector<1x16xf32>
    %13 = arith.subf %5, %4 : vector<1x16xf32>
    %cst_2 = arith.constant 9.99999968E-21 : f32
    %14 = vector.broadcast %cst_2 : f32 to vector<1x16xf32>
    %15 = arith.maximumf %13, %14 : vector<1x16xf32>
    %16 = arith.divf %12, %15 : vector<1x16xf32>
    %cst_3 = arith.constant 1.000000e+00 : f32
    %17 = vector.broadcast %cst_3 : f32 to vector<1x16xf32>
    %18 = arith.addf %17, %16 : vector<1x16xf32>
    %19 = math.log %18 : vector<1x16xf32>
    %cst_4 = arith.constant 5.000000e-01 : f32
    %20 = vector.broadcast %cst_4 : f32 to vector<1x16xf32>
    %21 = arith.mulf %20, %19 : vector<1x16xf32>
    %22 = tpu.concatenate %2, %3, %4, %5, %10, %21, %6 in 0 : vector<1x16xf32>, vector<1x16xf32>, vector<1x16xf32>, vector<1x16xf32>, vector<1x16xf32>, vector<1x16xf32>, vector<1x16xf32> -> vector<7x16xf32>
    %c0_5 = arith.constant 0 : index
    %c0_6 = arith.constant 0 : index
    %23 = vector.load %arg2[%c0_5, %c0_6] : memref<2x256xi32, #tpu.memory_space<vmem>>, vector<1x256xi32>
    %c1 = arith.constant 1 : index
    %c0_7 = arith.constant 0 : index
    %24 = vector.load %arg2[%c1, %c0_7] : memref<2x256xi32, #tpu.memory_space<vmem>>, vector<1x256xi32>
    %25 = tpu.iota {dimensions = array<i32: 0>} : vector<16x256xi32>
    %26 = vector.broadcast %23 : vector<1x256xi32> to vector<16x256xi32>
    %27 = arith.cmpi eq, %25, %26 : vector<16x256xi32>
    %28 = arith.extui %27 : vector<16x256xi1> to vector<16x256xi32>
    %29 = arith.sitofp %28 : vector<16x256xi32> to vector<16x256xf32>
    %30 = vector.broadcast %24 : vector<1x256xi32> to vector<16x256xi32>
    %31 = arith.cmpi eq, %25, %30 : vector<16x256xi32>
    %32 = arith.extui %31 : vector<16x256xi1> to vector<16x256xi32>
    %33 = arith.sitofp %32 : vector<16x256xi32> to vector<16x256xf32>
    %34 = arith.truncf %22 : vector<7x16xf32> to vector<7x16xbf16>
    %35 = arith.extf %34 : vector<7x16xbf16> to vector<7x16xf32>
    %36 = arith.subf %22, %35 : vector<7x16xf32>
    %cst_8 = arith.constant dense<0.000000e+00> : vector<7x256xf32>
    %37 = tpu.matmul %35, %29, %cst_8 {dimension_numbers = #tpu.dot_dimension_numbers<[1], [0], [0], [1], [0, 0, 1, 1], [], []>} : vector<7x16xf32>, vector<16x256xf32>, vector<7x256xf32> -> vector<7x256xf32>
    %cst_9 = arith.constant dense<0.000000e+00> : vector<7x256xf32>
    %38 = tpu.matmul %36, %29, %cst_9 {dimension_numbers = #tpu.dot_dimension_numbers<[1], [0], [0], [1], [0, 0, 1, 1], [], []>} : vector<7x16xf32>, vector<16x256xf32>, vector<7x256xf32> -> vector<7x256xf32>
    %39 = arith.addf %37, %38 : vector<7x256xf32>
    %cst_10 = arith.constant dense<0.000000e+00> : vector<7x256xf32>
    %40 = tpu.matmul %35, %33, %cst_10 {dimension_numbers = #tpu.dot_dimension_numbers<[1], [0], [0], [1], [0, 0, 1, 1], [], []>} : vector<7x16xf32>, vector<16x256xf32>, vector<7x256xf32> -> vector<7x256xf32>
    %cst_11 = arith.constant dense<0.000000e+00> : vector<7x256xf32>
    %41 = tpu.matmul %36, %33, %cst_11 {dimension_numbers = #tpu.dot_dimension_numbers<[1], [0], [0], [1], [0, 0, 1, 1], [], []>} : vector<7x16xf32>, vector<16x256xf32>, vector<7x256xf32> -> vector<7x256xf32>
    %42 = arith.addf %40, %41 : vector<7x256xf32>
    %43 = vector.extract_strided_slice %39 {offsets = [0, 0], sizes = [1, 256], strides = [1, 1]} : vector<7x256xf32> to vector<1x256xf32>
    %44 = vector.extract_strided_slice %39 {offsets = [1, 0], sizes = [1, 256], strides = [1, 1]} : vector<7x256xf32> to vector<1x256xf32>
    %45 = vector.extract_strided_slice %39 {offsets = [2, 0], sizes = [1, 256], strides = [1, 1]} : vector<7x256xf32> to vector<1x256xf32>
    %46 = vector.extract_strided_slice %39 {offsets = [3, 0], sizes = [1, 256], strides = [1, 1]} : vector<7x256xf32> to vector<1x256xf32>
    %47 = vector.extract_strided_slice %39 {offsets = [4, 0], sizes = [1, 256], strides = [1, 1]} : vector<7x256xf32> to vector<1x256xf32>
    %48 = vector.extract_strided_slice %39 {offsets = [5, 0], sizes = [1, 256], strides = [1, 1]} : vector<7x256xf32> to vector<1x256xf32>
    %49 = vector.extract_strided_slice %39 {offsets = [6, 0], sizes = [1, 256], strides = [1, 1]} : vector<7x256xf32> to vector<1x256xf32>
    %50 = vector.extract_strided_slice %42 {offsets = [0, 0], sizes = [1, 256], strides = [1, 1]} : vector<7x256xf32> to vector<1x256xf32>
    %51 = vector.extract_strided_slice %42 {offsets = [1, 0], sizes = [1, 256], strides = [1, 1]} : vector<7x256xf32> to vector<1x256xf32>
    %52 = vector.extract_strided_slice %42 {offsets = [2, 0], sizes = [1, 256], strides = [1, 1]} : vector<7x256xf32> to vector<1x256xf32>
    %53 = vector.extract_strided_slice %42 {offsets = [3, 0], sizes = [1, 256], strides = [1, 1]} : vector<7x256xf32> to vector<1x256xf32>
    %54 = vector.extract_strided_slice %42 {offsets = [4, 0], sizes = [1, 256], strides = [1, 1]} : vector<7x256xf32> to vector<1x256xf32>
    %55 = vector.extract_strided_slice %42 {offsets = [5, 0], sizes = [1, 256], strides = [1, 1]} : vector<7x256xf32> to vector<1x256xf32>
    %56 = vector.extract_strided_slice %42 {offsets = [6, 0], sizes = [1, 256], strides = [1, 1]} : vector<7x256xf32> to vector<1x256xf32>
    %57 = arith.subf %49, %56 : vector<1x256xf32>
    %cst_12 = arith.constant 3.14159274 : f32
    %58 = vector.broadcast %cst_12 : f32 to vector<1x256xf32>
    %59 = arith.addf %57, %58 : vector<1x256xf32>
    %cst_13 = arith.constant 6.28318548 : f32
    %60 = vector.broadcast %cst_13 : f32 to vector<1x256xf32>
    %61 = arith.divf %59, %60 : vector<1x256xf32>
    %62 = math.floor %61 : vector<1x256xf32>
    %cst_14 = arith.constant 6.28318548 : f32
    %63 = vector.broadcast %cst_14 : f32 to vector<1x256xf32>
    %64 = arith.mulf %63, %62 : vector<1x256xf32>
    %65 = arith.subf %59, %64 : vector<1x256xf32>
    %cst_15 = arith.constant 3.14159274 : f32
    %66 = vector.broadcast %cst_15 : f32 to vector<1x256xf32>
    %67 = arith.subf %65, %66 : vector<1x256xf32>
    %68 = arith.subf %48, %55 : vector<1x256xf32>
    %69 = arith.mulf %68, %68 : vector<1x256xf32>
    %70 = arith.mulf %67, %67 : vector<1x256xf32>
    %71 = arith.addf %69, %70 : vector<1x256xf32>
    %72 = math.sqrt %71 : vector<1x256xf32>
    %cst_16 = arith.constant 9.99999993E-9 : f32
    %73 = vector.broadcast %cst_16 : f32 to vector<1x256xf32>
    %74 = arith.maximumf %72, %73 : vector<1x256xf32>
    %cst_17 = arith.constant 1.000000e+00 : f32
    %75 = vector.broadcast %cst_17 : f32 to vector<1x256xf32>
    %76 = arith.addf %74, %75 : vector<1x256xf32>
    %77 = math.log %76 : vector<1x256xf32>
    %78 = arith.minimumf %47, %54 : vector<1x256xf32>
    %79 = arith.mulf %78, %72 : vector<1x256xf32>
    %cst_18 = arith.constant 9.99999993E-9 : f32
    %80 = vector.broadcast %cst_18 : f32 to vector<1x256xf32>
    %81 = arith.maximumf %79, %80 : vector<1x256xf32>
    %cst_19 = arith.constant 1.000000e+00 : f32
    %82 = vector.broadcast %cst_19 : f32 to vector<1x256xf32>
    %83 = arith.addf %81, %82 : vector<1x256xf32>
    %84 = math.log %83 : vector<1x256xf32>
    %85 = arith.addf %47, %54 : vector<1x256xf32>
    %cst_20 = arith.constant 9.99999993E-9 : f32
    %86 = vector.broadcast %cst_20 : f32 to vector<1x256xf32>
    %87 = arith.maximumf %85, %86 : vector<1x256xf32>
    %88 = arith.divf %78, %87 : vector<1x256xf32>
    %cst_21 = arith.constant 9.99999993E-9 : f32
    %89 = vector.broadcast %cst_21 : f32 to vector<1x256xf32>
    %90 = arith.maximumf %88, %89 : vector<1x256xf32>
    %cst_22 = arith.constant 1.000000e+00 : f32
    %91 = vector.broadcast %cst_22 : f32 to vector<1x256xf32>
    %92 = arith.addf %90, %91 : vector<1x256xf32>
    %93 = math.log %92 : vector<1x256xf32>
    %94 = arith.addf %43, %50 : vector<1x256xf32>
    %95 = arith.addf %44, %51 : vector<1x256xf32>
    %96 = arith.addf %45, %52 : vector<1x256xf32>
    %97 = arith.addf %46, %53 : vector<1x256xf32>
    %98 = arith.mulf %97, %97 : vector<1x256xf32>
    %99 = arith.mulf %94, %94 : vector<1x256xf32>
    %100 = arith.mulf %95, %95 : vector<1x256xf32>
    %101 = arith.addf %99, %100 : vector<1x256xf32>
    %102 = arith.mulf %96, %96 : vector<1x256xf32>
    %103 = arith.addf %101, %102 : vector<1x256xf32>
    %104 = arith.subf %98, %103 : vector<1x256xf32>
    %cst_23 = arith.constant 9.99999993E-9 : f32
    %105 = vector.broadcast %cst_23 : f32 to vector<1x256xf32>
    %106 = arith.maximumf %104, %105 : vector<1x256xf32>
    %cst_24 = arith.constant 1.000000e+00 : f32
    %107 = vector.broadcast %cst_24 : f32 to vector<1x256xf32>
    %108 = arith.addf %106, %107 : vector<1x256xf32>
    %109 = math.log %108 : vector<1x256xf32>
    %cst_25 = arith.constant 0.000000e+00 : f32
    %110 = vector.broadcast %cst_25 : f32 to vector<1x256xf32>
    %111 = arith.cmpf one, %47, %110 : vector<1x256xf32>
    %cst_26 = arith.constant 0.000000e+00 : f32
    %112 = vector.broadcast %cst_26 : f32 to vector<1x256xf32>
    %113 = arith.cmpf one, %54, %112 : vector<1x256xf32>
    %114 = arith.andi %111, %113 : vector<1x256xi1>
    %115 = arith.extui %114 : vector<1x256xi1> to vector<1x256xi32>
    %116 = arith.sitofp %115 : vector<1x256xi32> to vector<1x256xf32>
    %117 = tpu.concatenate %84, %93, %77, %109 in 0 : vector<1x256xf32>, vector<1x256xf32>, vector<1x256xf32>, vector<1x256xf32> -> vector<4x256xf32>
    %118 = vector.broadcast %116 : vector<1x256xf32> to vector<4x256xf32>
    %119 = arith.mulf %117, %118 : vector<4x256xf32>
    %c0_27 = arith.constant 0 : index
    %c0_28 = arith.constant 0 : index
    %120 = vector.load %arg3[%c0_27, %c0_28] : memref<4x1xf32, #tpu.memory_space<vmem>>, vector<4x1xf32>
    %121 = vector.broadcast %120 : vector<4x1xf32> to vector<4x256xf32>
    %122 = arith.mulf %119, %121 : vector<4x256xf32>
    %c0_29 = arith.constant 0 : index
    %c0_30 = arith.constant 0 : index
    %123 = vector.load %arg4[%c0_29, %c0_30] : memref<4x1xf32, #tpu.memory_space<vmem>>, vector<4x1xf32>
    %124 = vector.broadcast %123 : vector<4x1xf32> to vector<4x256xf32>
    %125 = arith.addf %122, %124 : vector<4x256xf32>
    %cst_31 = arith.constant 5.000000e-01 : f32
    %126 = vector.broadcast %cst_31 : f32 to vector<4x256xf32>
    %127 = arith.mulf %126, %125 : vector<4x256xf32>
    %cst_32 = arith.constant 0.707106769 : f32
    %128 = vector.broadcast %cst_32 : f32 to vector<4x256xf32>
    %129 = arith.mulf %125, %128 : vector<4x256xf32>
    %cst_33 = arith.constant 0.000000e+00 : f32
    %130 = vector.broadcast %cst_33 : f32 to vector<4x256xf32>
    %131 = arith.cmpf olt, %129, %130 : vector<4x256xf32>
    %cst_34 = arith.constant -1.000000e+00 : f32
    %cst_35 = arith.constant 1.000000e+00 : f32
    %132 = vector.broadcast %cst_34 : f32 to vector<4x256xf32>
    %133 = vector.broadcast %cst_35 : f32 to vector<4x256xf32>
    %134 = arith.select %131, %132, %133 : vector<4x256xi1>, vector<4x256xf32>
    %135 = math.absf %129 : vector<4x256xf32>
    %cst_36 = arith.constant 0.327591091 : f32
    %136 = vector.broadcast %cst_36 : f32 to vector<4x256xf32>
    %137 = arith.mulf %136, %135 : vector<4x256xf32>
    %cst_37 = arith.constant 1.000000e+00 : f32
    %138 = vector.broadcast %cst_37 : f32 to vector<4x256xf32>
    %139 = arith.addf %138, %137 : vector<4x256xf32>
    %cst_38 = arith.constant 1.000000e+00 : f32
    %140 = vector.broadcast %cst_38 : f32 to vector<4x256xf32>
    %141 = arith.divf %140, %139 : vector<4x256xf32>
    %cst_39 = arith.constant 1.06140542 : f32
    %142 = vector.broadcast %cst_39 : f32 to vector<4x256xf32>
    %143 = arith.mulf %141, %142 : vector<4x256xf32>
    %cst_40 = arith.constant -1.45315206 : f32
    %144 = vector.broadcast %cst_40 : f32 to vector<4x256xf32>
    %145 = arith.addf %144, %143 : vector<4x256xf32>
    %146 = arith.mulf %141, %145 : vector<4x256xf32>
    %cst_41 = arith.constant 1.42141378 : f32
    %147 = vector.broadcast %cst_41 : f32 to vector<4x256xf32>
    %148 = arith.addf %147, %146 : vector<4x256xf32>
    %149 = arith.mulf %141, %148 : vector<4x256xf32>
    %cst_42 = arith.constant -0.284496725 : f32
    %150 = vector.broadcast %cst_42 : f32 to vector<4x256xf32>
    %151 = arith.addf %150, %149 : vector<4x256xf32>
    %152 = arith.mulf %141, %151 : vector<4x256xf32>
    %cst_43 = arith.constant 0.254829586 : f32
    %153 = vector.broadcast %cst_43 : f32 to vector<4x256xf32>
    %154 = arith.addf %153, %152 : vector<4x256xf32>
    %155 = arith.mulf %141, %154 : vector<4x256xf32>
    %cst_44 = arith.constant 0.000000e+00 : f32
    %156 = vector.broadcast %cst_44 : f32 to vector<4x256xf32>
    %157 = arith.subf %156, %135 : vector<4x256xf32>
    %158 = arith.mulf %157, %135 : vector<4x256xf32>
    %159 = math.exp %158 : vector<4x256xf32>
    %160 = arith.mulf %155, %159 : vector<4x256xf32>
    %cst_45 = arith.constant 1.000000e+00 : f32
    %161 = vector.broadcast %cst_45 : f32 to vector<4x256xf32>
    %162 = arith.subf %161, %160 : vector<4x256xf32>
    %163 = arith.mulf %134, %162 : vector<4x256xf32>
    %cst_46 = arith.constant 1.000000e+00 : f32
    %164 = vector.broadcast %cst_46 : f32 to vector<4x256xf32>
    %165 = arith.addf %164, %163 : vector<4x256xf32>
    %166 = arith.mulf %127, %165 : vector<4x256xf32>
    %c0_47 = arith.constant 0 : index
    %c0_48 = arith.constant 0 : index
    %167 = vector.load %arg5[%c0_47, %c0_48] : memref<32x4xf32, #tpu.memory_space<vmem>>, vector<32x4xf32>
    %cst_49 = arith.constant dense<0.000000e+00> : vector<32x256xf32>
    %168 = tpu.matmul %167, %166, %cst_49 {dimension_numbers = #tpu.dot_dimension_numbers<[1], [0], [0], [1], [0, 0, 1, 1], [], []>} : vector<32x4xf32>, vector<4x256xf32>, vector<32x256xf32> -> vector<32x256xf32>
    %c0_50 = arith.constant 0 : index
    %c0_51 = arith.constant 0 : index
    %169 = vector.load %arg6[%c0_50, %c0_51] : memref<32x1xf32, #tpu.memory_space<vmem>>, vector<32x1xf32>
    %170 = vector.broadcast %169 : vector<32x1xf32> to vector<32x256xf32>
    %171 = arith.addf %168, %170 : vector<32x256xf32>
    %c0_52 = arith.constant 0 : index
    %c0_53 = arith.constant 0 : index
    %172 = vector.load %arg7[%c0_52, %c0_53] : memref<32x1xf32, #tpu.memory_space<vmem>>, vector<32x1xf32>
    %173 = vector.broadcast %172 : vector<32x1xf32> to vector<32x256xf32>
    %174 = arith.mulf %171, %173 : vector<32x256xf32>
    %c0_54 = arith.constant 0 : index
    %c0_55 = arith.constant 0 : index
    %175 = vector.load %arg8[%c0_54, %c0_55] : memref<32x1xf32, #tpu.memory_space<vmem>>, vector<32x1xf32>
    %176 = vector.broadcast %175 : vector<32x1xf32> to vector<32x256xf32>
    %177 = arith.addf %174, %176 : vector<32x256xf32>
    %cst_56 = arith.constant 5.000000e-01 : f32
    %178 = vector.broadcast %cst_56 : f32 to vector<32x256xf32>
    %179 = arith.mulf %178, %177 : vector<32x256xf32>
    %cst_57 = arith.constant 0.707106769 : f32
    %180 = vector.broadcast %cst_57 : f32 to vector<32x256xf32>
    %181 = arith.mulf %177, %180 : vector<32x256xf32>
    %cst_58 = arith.constant 0.000000e+00 : f32
    %182 = vector.broadcast %cst_58 : f32 to vector<32x256xf32>
    %183 = arith.cmpf olt, %181, %182 : vector<32x256xf32>
    %cst_59 = arith.constant -1.000000e+00 : f32
    %cst_60 = arith.constant 1.000000e+00 : f32
    %184 = vector.broadcast %cst_59 : f32 to vector<32x256xf32>
    %185 = vector.broadcast %cst_60 : f32 to vector<32x256xf32>
    %186 = arith.select %183, %184, %185 : vector<32x256xi1>, vector<32x256xf32>
    %187 = math.absf %181 : vector<32x256xf32>
    %cst_61 = arith.constant 0.327591091 : f32
    %188 = vector.broadcast %cst_61 : f32 to vector<32x256xf32>
    %189 = arith.mulf %188, %187 : vector<32x256xf32>
    %cst_62 = arith.constant 1.000000e+00 : f32
    %190 = vector.broadcast %cst_62 : f32 to vector<32x256xf32>
    %191 = arith.addf %190, %189 : vector<32x256xf32>
    %cst_63 = arith.constant 1.000000e+00 : f32
    %192 = vector.broadcast %cst_63 : f32 to vector<32x256xf32>
    %193 = arith.divf %192, %191 : vector<32x256xf32>
    %cst_64 = arith.constant 1.06140542 : f32
    %194 = vector.broadcast %cst_64 : f32 to vector<32x256xf32>
    %195 = arith.mulf %193, %194 : vector<32x256xf32>
    %cst_65 = arith.constant -1.45315206 : f32
    %196 = vector.broadcast %cst_65 : f32 to vector<32x256xf32>
    %197 = arith.addf %196, %195 : vector<32x256xf32>
    %198 = arith.mulf %193, %197 : vector<32x256xf32>
    %cst_66 = arith.constant 1.42141378 : f32
    %199 = vector.broadcast %cst_66 : f32 to vector<32x256xf32>
    %200 = arith.addf %199, %198 : vector<32x256xf32>
    %201 = arith.mulf %193, %200 : vector<32x256xf32>
    %cst_67 = arith.constant -0.284496725 : f32
    %202 = vector.broadcast %cst_67 : f32 to vector<32x256xf32>
    %203 = arith.addf %202, %201 : vector<32x256xf32>
    %204 = arith.mulf %193, %203 : vector<32x256xf32>
    %cst_68 = arith.constant 0.254829586 : f32
    %205 = vector.broadcast %cst_68 : f32 to vector<32x256xf32>
    %206 = arith.addf %205, %204 : vector<32x256xf32>
    %207 = arith.mulf %193, %206 : vector<32x256xf32>
    %cst_69 = arith.constant 0.000000e+00 : f32
    %208 = vector.broadcast %cst_69 : f32 to vector<32x256xf32>
    %209 = arith.subf %208, %187 : vector<32x256xf32>
    %210 = arith.mulf %209, %187 : vector<32x256xf32>
    %211 = math.exp %210 : vector<32x256xf32>
    %212 = arith.mulf %207, %211 : vector<32x256xf32>
    %cst_70 = arith.constant 1.000000e+00 : f32
    %213 = vector.broadcast %cst_70 : f32 to vector<32x256xf32>
    %214 = arith.subf %213, %212 : vector<32x256xf32>
    %215 = arith.mulf %186, %214 : vector<32x256xf32>
    %cst_71 = arith.constant 1.000000e+00 : f32
    %216 = vector.broadcast %cst_71 : f32 to vector<32x256xf32>
    %217 = arith.addf %216, %215 : vector<32x256xf32>
    %218 = arith.mulf %179, %217 : vector<32x256xf32>
    %c0_72 = arith.constant 0 : index
    %c0_73 = arith.constant 0 : index
    %219 = vector.load %arg9[%c0_72, %c0_73] : memref<32x32xf32, #tpu.memory_space<vmem>>, vector<32x32xf32>
    %cst_74 = arith.constant dense<0.000000e+00> : vector<32x256xf32>
    %220 = tpu.matmul %219, %218, %cst_74 {dimension_numbers = #tpu.dot_dimension_numbers<[1], [0], [0], [1], [0, 0, 1, 1], [], []>} : vector<32x32xf32>, vector<32x256xf32>, vector<32x256xf32> -> vector<32x256xf32>
    %c0_75 = arith.constant 0 : index
    %c0_76 = arith.constant 0 : index
    %221 = vector.load %arg10[%c0_75, %c0_76] : memref<32x1xf32, #tpu.memory_space<vmem>>, vector<32x1xf32>
    %222 = vector.broadcast %221 : vector<32x1xf32> to vector<32x256xf32>
    %223 = arith.addf %220, %222 : vector<32x256xf32>
    %c0_77 = arith.constant 0 : index
    %c0_78 = arith.constant 0 : index
    %224 = vector.load %arg11[%c0_77, %c0_78] : memref<32x1xf32, #tpu.memory_space<vmem>>, vector<32x1xf32>
    %225 = vector.broadcast %224 : vector<32x1xf32> to vector<32x256xf32>
    %226 = arith.mulf %223, %225 : vector<32x256xf32>
    %c0_79 = arith.constant 0 : index
    %c0_80 = arith.constant 0 : index
    %227 = vector.load %arg12[%c0_79, %c0_80] : memref<32x1xf32, #tpu.memory_space<vmem>>, vector<32x1xf32>
    %228 = vector.broadcast %227 : vector<32x1xf32> to vector<32x256xf32>
    %229 = arith.addf %226, %228 : vector<32x256xf32>
    %cst_81 = arith.constant 5.000000e-01 : f32
    %230 = vector.broadcast %cst_81 : f32 to vector<32x256xf32>
    %231 = arith.mulf %230, %229 : vector<32x256xf32>
    %cst_82 = arith.constant 0.707106769 : f32
    %232 = vector.broadcast %cst_82 : f32 to vector<32x256xf32>
    %233 = arith.mulf %229, %232 : vector<32x256xf32>
    %cst_83 = arith.constant 0.000000e+00 : f32
    %234 = vector.broadcast %cst_83 : f32 to vector<32x256xf32>
    %235 = arith.cmpf olt, %233, %234 : vector<32x256xf32>
    %cst_84 = arith.constant -1.000000e+00 : f32
    %cst_85 = arith.constant 1.000000e+00 : f32
    %236 = vector.broadcast %cst_84 : f32 to vector<32x256xf32>
    %237 = vector.broadcast %cst_85 : f32 to vector<32x256xf32>
    %238 = arith.select %235, %236, %237 : vector<32x256xi1>, vector<32x256xf32>
    %239 = math.absf %233 : vector<32x256xf32>
    %cst_86 = arith.constant 0.327591091 : f32
    %240 = vector.broadcast %cst_86 : f32 to vector<32x256xf32>
    %241 = arith.mulf %240, %239 : vector<32x256xf32>
    %cst_87 = arith.constant 1.000000e+00 : f32
    %242 = vector.broadcast %cst_87 : f32 to vector<32x256xf32>
    %243 = arith.addf %242, %241 : vector<32x256xf32>
    %cst_88 = arith.constant 1.000000e+00 : f32
    %244 = vector.broadcast %cst_88 : f32 to vector<32x256xf32>
    %245 = arith.divf %244, %243 : vector<32x256xf32>
    %cst_89 = arith.constant 1.06140542 : f32
    %246 = vector.broadcast %cst_89 : f32 to vector<32x256xf32>
    %247 = arith.mulf %245, %246 : vector<32x256xf32>
    %cst_90 = arith.constant -1.45315206 : f32
    %248 = vector.broadcast %cst_90 : f32 to vector<32x256xf32>
    %249 = arith.addf %248, %247 : vector<32x256xf32>
    %250 = arith.mulf %245, %249 : vector<32x256xf32>
    %cst_91 = arith.constant 1.42141378 : f32
    %251 = vector.broadcast %cst_91 : f32 to vector<32x256xf32>
    %252 = arith.addf %251, %250 : vector<32x256xf32>
    %253 = arith.mulf %245, %252 : vector<32x256xf32>
    %cst_92 = arith.constant -0.284496725 : f32
    %254 = vector.broadcast %cst_92 : f32 to vector<32x256xf32>
    %255 = arith.addf %254, %253 : vector<32x256xf32>
    %256 = arith.mulf %245, %255 : vector<32x256xf32>
    %cst_93 = arith.constant 0.254829586 : f32
    %257 = vector.broadcast %cst_93 : f32 to vector<32x256xf32>
    %258 = arith.addf %257, %256 : vector<32x256xf32>
    %259 = arith.mulf %245, %258 : vector<32x256xf32>
    %cst_94 = arith.constant 0.000000e+00 : f32
    %260 = vector.broadcast %cst_94 : f32 to vector<32x256xf32>
    %261 = arith.subf %260, %239 : vector<32x256xf32>
    %262 = arith.mulf %261, %239 : vector<32x256xf32>
    %263 = math.exp %262 : vector<32x256xf32>
    %264 = arith.mulf %259, %263 : vector<32x256xf32>
    %cst_95 = arith.constant 1.000000e+00 : f32
    %265 = vector.broadcast %cst_95 : f32 to vector<32x256xf32>
    %266 = arith.subf %265, %264 : vector<32x256xf32>
    %267 = arith.mulf %238, %266 : vector<32x256xf32>
    %cst_96 = arith.constant 1.000000e+00 : f32
    %268 = vector.broadcast %cst_96 : f32 to vector<32x256xf32>
    %269 = arith.addf %268, %267 : vector<32x256xf32>
    %270 = arith.mulf %231, %269 : vector<32x256xf32>
    %c0_97 = arith.constant 0 : index
    %c0_98 = arith.constant 0 : index
    %271 = vector.load %arg13[%c0_97, %c0_98] : memref<8x32xf32, #tpu.memory_space<vmem>>, vector<8x32xf32>
    %cst_99 = arith.constant dense<0.000000e+00> : vector<8x256xf32>
    %272 = tpu.matmul %271, %270, %cst_99 {dimension_numbers = #tpu.dot_dimension_numbers<[1], [0], [0], [1], [0, 0, 1, 1], [], []>} : vector<8x32xf32>, vector<32x256xf32>, vector<8x256xf32> -> vector<8x256xf32>
    %c0_100 = arith.constant 0 : index
    %c0_101 = arith.constant 0 : index
    %273 = vector.load %arg14[%c0_100, %c0_101] : memref<8x1xf32, #tpu.memory_space<vmem>>, vector<8x1xf32>
    %274 = vector.broadcast %273 : vector<8x1xf32> to vector<8x256xf32>
    %275 = arith.addf %272, %274 : vector<8x256xf32>
    %276 = arith.cmpi ne, %23, %24 : vector<1x256xi32>
    %277 = arith.extui %276 : vector<1x256xi1> to vector<1x256xi32>
    %278 = arith.sitofp %277 : vector<1x256xi32> to vector<1x256xf32>
    %279 = vector.broadcast %278 : vector<1x256xf32> to vector<8x256xf32>
    %280 = arith.mulf %275, %279 : vector<8x256xf32>
    %c0_102 = arith.constant 0 : index
    %c0_103 = arith.constant 0 : index
    %c0_104 = arith.constant 0 : index
    %281 = vector.load %arg15[%c0_102, %c0_103, %c0_104] : memref<1x8x256xf32, #tpu.memory_space<vmem>>, vector<1x8x256xf32>
    %282 = vector.shape_cast %281 : vector<1x8x256xf32> to vector<8x256xf32>
    %283 = vector.shape_cast %280 : vector<8x256xf32> to vector<1x8x256xf32>
    tpu.vector_store %arg15[%c0_102, %c0_103, %c0_104], %283 {strides = array<i32>} : memref<1x8x256xf32, #tpu.memory_space<vmem>>, vector<1x8x256xf32>,
    return
  }
  func.func @transform_0(%arg0: i32) -> (i32, i32, i32) {
    %c0_i32 = arith.constant 0 : i32
    %c0_i32_0 = arith.constant 0 : i32
    %c0_i32_1 = arith.constant 0 : i32
    return %arg0, %c0_i32, %c0_i32_0 : i32, i32, i32
  }
  func.func @transform_1(%arg0: i32) -> (i32, i32) {
    %c0_i32 = arith.constant 0 : i32
    %c0_i32_0 = arith.constant 0 : i32
    %c0_i32_1 = arith.constant 0 : i32
    return %c0_i32, %c0_i32_0 : i32, i32
  }
  func.func @transform_2(%arg0: i32) -> (i32, i32) {
    %c0_i32 = arith.constant 0 : i32
    %c0_i32_0 = arith.constant 0 : i32
    %c0_i32_1 = arith.constant 0 : i32
    return %c0_i32, %c0_i32_0 : i32, i32
  }
  func.func @transform_3(%arg0: i32) -> (i32, i32) {
    %c0_i32 = arith.constant 0 : i32
    %c0_i32_0 = arith.constant 0 : i32
    %c0_i32_1 = arith.constant 0 : i32
    return %c0_i32, %c0_i32_0 : i32, i32
  }
  func.func @transform_4(%arg0: i32) -> (i32, i32) {
    %c0_i32 = arith.constant 0 : i32
    %c0_i32_0 = arith.constant 0 : i32
    %c0_i32_1 = arith.constant 0 : i32
    return %c0_i32, %c0_i32_0 : i32, i32
  }
  func.func @transform_5(%arg0: i32) -> (i32, i32) {
    %c0_i32 = arith.constant 0 : i32
    %c0_i32_0 = arith.constant 0 : i32
    %c0_i32_1 = arith.constant 0 : i32
    return %c0_i32, %c0_i32_0 : i32, i32
  }
  func.func @transform_6(%arg0: i32) -> (i32, i32) {
    %c0_i32 = arith.constant 0 : i32
    %c0_i32_0 = arith.constant 0 : i32
    %c0_i32_1 = arith.constant 0 : i32
    return %c0_i32, %c0_i32_0 : i32, i32
  }
  func.func @transform_7(%arg0: i32) -> (i32, i32) {
    %c0_i32 = arith.constant 0 : i32
    %c0_i32_0 = arith.constant 0 : i32
    %c0_i32_1 = arith.constant 0 : i32
    return %c0_i32, %c0_i32_0 : i32, i32
  }
  func.func @transform_8(%arg0: i32) -> (i32, i32) {
    %c0_i32 = arith.constant 0 : i32
    %c0_i32_0 = arith.constant 0 : i32
    %c0_i32_1 = arith.constant 0 : i32
    return %c0_i32, %c0_i32_0 : i32, i32
  }
  func.func @transform_9(%arg0: i32) -> (i32, i32) {
    %c0_i32 = arith.constant 0 : i32
    %c0_i32_0 = arith.constant 0 : i32
    %c0_i32_1 = arith.constant 0 : i32
    return %c0_i32, %c0_i32_0 : i32, i32
  }
  func.func @transform_10(%arg0: i32) -> (i32, i32) {
    %c0_i32 = arith.constant 0 : i32
    %c0_i32_0 = arith.constant 0 : i32
    %c0_i32_1 = arith.constant 0 : i32
    return %c0_i32, %c0_i32_0 : i32, i32
  }
  func.func @transform_11(%arg0: i32) -> (i32, i32) {
    %c0_i32 = arith.constant 0 : i32
    %c0_i32_0 = arith.constant 0 : i32
    %c0_i32_1 = arith.constant 0 : i32
    return %c0_i32, %c0_i32_0 : i32, i32
  }
  func.func @transform_12(%arg0: i32) -> (i32, i32) {
    %c0_i32 = arith.constant 0 : i32
    %c0_i32_0 = arith.constant 0 : i32
    %c0_i32_1 = arith.constant 0 : i32
    return %c0_i32, %c0_i32_0 : i32, i32
  }
  func.func @transform_13(%arg0: i32) -> (i32, i32) {
    %c0_i32 = arith.constant 0 : i32
    %c0_i32_0 = arith.constant 0 : i32
    %c0_i32_1 = arith.constant 0 : i32
    return %c0_i32, %c0_i32_0 : i32, i32
  }
  func.func @transform_14(%arg0: i32) -> (i32, i32, i32) {
    %c0_i32 = arith.constant 0 : i32
    %c0_i32_0 = arith.constant 0 : i32
    %c0_i32_1 = arith.constant 0 : i32
    return %arg0, %c0_i32, %c0_i32_0 : i32, i32, i32
  }
}

</mosaic_0001>

<llo_original>
// kernel: tpu_custom_call.1
$region0: #{tpu_custom_call.1}
  #allocation0 [shape = 'u32[]', space=smem, size = 0x4, offset = 0x4, fixed_abs, tag = 'smem constant byte address 0x4 - core index']
  #allocation1 [shape = 'u32[144,128]{1,0:T(1,128)}', space=vmem, size = 0x12000, scoped, tag = 'internal scratch']
  %s0 = inlined_call_operand.vmem [shape: f32[2,5,16], index: 0, kind: input, shape index: {}]
  %s1 = inlined_call_operand.vmem [shape: s32[2,256], index: 1, kind: input, shape index: {}]
  %s2 = inlined_call_operand.vmem [shape: f32[4,1], index: 2, kind: input, shape index: {}]
  %s3 = inlined_call_operand.vmem [shape: f32[4,1], index: 3, kind: input, shape index: {}]
  %s4 = inlined_call_operand.vmem [shape: f32[32,4], index: 4, kind: input, shape index: {}]
  %s5 = inlined_call_operand.vmem [shape: f32[32,1], index: 5, kind: input, shape index: {}]
  %s6 = inlined_call_operand.vmem [shape: f32[32,1], index: 6, kind: input, shape index: {}]
  %s7 = inlined_call_operand.vmem [shape: f32[32,1], index: 7, kind: input, shape index: {}]
  %s8 = inlined_call_operand.vmem [shape: f32[32,32], index: 8, kind: input, shape index: {}]
  %s9 = inlined_call_operand.vmem [shape: f32[32,1], index: 9, kind: input, shape index: {}]
  %s10 = inlined_call_operand.vmem [shape: f32[32,1], index: 10, kind: input, shape index: {}]
  %s11 = inlined_call_operand.vmem [shape: f32[32,1], index: 11, kind: input, shape index: {}]
  %s12 = inlined_call_operand.vmem [shape: f32[8,32], index: 12, kind: input, shape index: {}]
  %s13 = inlined_call_operand.vmem [shape: f32[8,1], index: 13, kind: input, shape index: {}]
  %s14 = inlined_call_operand.hbm [shape: f32[2,8,256], index: 14, kind: output, shape index: {}]
  %s15 = sld [smem:[#allocation0]]
  $region89: #{tpu_custom_call.1} parent=0
    _
  %s17 = ssub.s32 1, %s15
  %s18 = scalar_select 0, %s17, %s15
  $region1: #{tpu_custom_call.1} parent=0
    #allocation2 [shape = 'u8[16384]{0}', space=vmem, size = 0x4000, scoped, tag = 'output window, operand 0']
    #allocation3 [shape = 's32[2]{0}', space=sflag, size = 0x8, scoped, tag = 'scoped memory for tpu_custom_call.1']
    %19 = vsyncpa [#allocation3], 0
    %s20 = scalar_lea.sflag [#allocation3], 1
    %21 = vsyncpa %s20, 0
    loop: start=0, step=1, limit=4
    $region2: #{tpu_custom_call.1} parent=1 // loop_pre_header
      _
    $region3: #{tpu_custom_call.1} parent=1 // loop_header
      %s23 = sphi 0, %s27
      %p24 = scmp.ge.s32.totalorder %s23, 4
      %s33 = sphi 0, %s35
      %s36 = sphi 0, %s33
      %s37 = sphi 0, %s36
      %s53 = sphi 0, %s37
      %s57 = sphi 0, %s57
      %s59 = sphi 0, %s57
      %s60 = sphi 0, %s59
      %s74 = sphi 0, %s60
      %s78 = sphi 0, %s78
      %s80 = sphi 0, %s78
      %s81 = sphi 0, %s80
      %s95 = sphi 0, %s81
      %s99 = sphi 0, %s99
      %s101 = sphi 0, %s99
      %s102 = sphi 0, %s101
      %s116 = sphi 0, %s102
      %s120 = sphi 0, %s120
      %s122 = sphi 0, %s120
      %s123 = sphi 0, %s122
      %s137 = sphi 0, %s123
      %s141 = sphi 0, %s141
      %s143 = sphi 0, %s141
      %s144 = sphi 0, %s143
      %s158 = sphi 0, %s144
      %s162 = sphi 0, %s162
      %s164 = sphi 0, %s162
      %s165 = sphi 0, %s164
      %s179 = sphi 0, %s165
      %s183 = sphi 0, %s183
      %s185 = sphi 0, %s183
      %s186 = sphi 0, %s185
      %s200 = sphi 0, %s186
      %s204 = sphi 0, %s204
      %s206 = sphi 0, %s204
      %s207 = sphi 0, %s206
      %s221 = sphi 0, %s207
      %s225 = sphi 0, %s225
      %s227 = sphi 0, %s225
      %s228 = sphi 0, %s227
      %s242 = sphi 0, %s228
      %s246 = sphi 0, %s246
      %s248 = sphi 0, %s246
      %s249 = sphi 0, %s248
      %s263 = sphi 0, %s249
      %s267 = sphi 0, %s267
      %s269 = sphi 0, %s267
      %s270 = sphi 0, %s269
      %s284 = sphi 0, %s270
      %s288 = sphi 0, %s288
      %s290 = sphi 0, %s288
      %s291 = sphi 0, %s290
      %s305 = sphi 0, %s291
      %s309 = sphi 0, %s309
      %s311 = sphi 0, %s309
      %s312 = sphi 0, %s311
      %s326 = sphi 0, %s312
      %s332 = sphi 0, %s334
      %s335 = sphi 0, %s332
      %s336 = sphi 0, %s335
      %s352 = sphi 0, %s336
    $region4: #{tpu_custom_call.1} parent=1 // loop_header_branch
      %26 = sbr.rel (%p24) target = $region8
    $region5: #{tpu_custom_call.1} parent=1 // loop_body
      %s28 = ssub.s32 %s23, 1
      %s29 = ssub.s32 %s23, 2
      %s30 = sadd.s32 %s23, 1
      %s31 = ssub.s32 %s23, %s30
      %p32 = scmp.eq.s32.totalorder %s31, 0
      %s34 = sadd.s32 %s33, 1
      %s35 = scalar_select %p32, %s33, %s34
      %p38 = pneg %p32
      %p39 = scmp.eq.s32.totalorder %s23, 1
      %p40 = por %p38, %p39
      %p41 = scmp.ne.s32.totalorder %s33, %s36
      %p42 = scmp.eq.s32.totalorder %s23, 0
      %p43 = por %p41, %p42
      %p44 = scmp.ne.s32.totalorder %s33, %s36
      %p45 = scmp.eq.s32.totalorder %s28, 1
      %p46 = por %p44, %p45
      %p47 = scmp.ne.s32.totalorder %s36, %s37
      %p48 = scmp.eq.s32.totalorder %s28, 0
      %p49 = por %p47, %p48
      %p50 = scmp.ne.s32.totalorder %s36, %s37
      %p51 = scmp.eq.s32.totalorder %s29, 1
      %p52 = por %p50, %p51
      %p54 = scmp.ne.s32.totalorder %s37, %s53
      %p55 = scmp.eq.s32.totalorder %s29, 0
      %p56 = por %p54, %p55
      %s58 = sadd.s32 %s57, 1
      %p61 = scmp.eq.s32.totalorder %s23, 1
      %p62 = scmp.ne.s32.totalorder %s57, %s59
      %p63 = scmp.eq.s32.totalorder %s23, 0
      %p64 = por %p62, %p63
      %p65 = scmp.ne.s32.totalorder %s57, %s59
      %p66 = scmp.eq.s32.totalorder %s28, 1
      %p67 = por %p65, %p66
      %p68 = scmp.ne.s32.totalorder %s59, %s60
      %p69 = scmp.eq.s32.totalorder %s28, 0
      %p70 = por %p68, %p69
      %p71 = scmp.ne.s32.totalorder %s59, %s60
      %p72 = scmp.eq.s32.totalorder %s29, 1
      %p73 = por %p71, %p72
      %p75 = scmp.ne.s32.totalorder %s60, %s74
      %p76 = scmp.eq.s32.totalorder %s29, 0
      %p77 = por %p75, %p76
      %s79 = sadd.s32 %s78, 1
      %p82 = scmp.eq.s32.totalorder %s23, 1
      %p83 = scmp.ne.s32.totalorder %s78, %s80
      %p84 = scmp.eq.s32.totalorder %s23, 0
      %p85 = por %p83, %p84
      %p86 = scmp.ne.s32.totalorder %s78, %s80
      %p87 = scmp.eq.s32.totalorder %s28, 1
      %p88 = por %p86, %p87
      %p89 = scmp.ne.s32.totalorder %s80, %s81
      %p90 = scmp.eq.s32.totalorder %s28, 0
      %p91 = por %p89, %p90
      %p92 = scmp.ne.s32.totalorder %s80, %s81
      %p93 = scmp.eq.s32.totalorder %s29, 1
      %p94 = por %p92, %p93
      %p96 = scmp.ne.s32.totalorder %s81, %s95
      %p97 = scmp.eq.s32.totalorder %s29, 0
      %p98 = por %p96, %p97
      %s100 = sadd.s32 %s99, 1
      %p103 = scmp.eq.s32.totalorder %s23, 1
      %p104 = scmp.ne.s32.totalorder %s99, %s101
      %p105 = scmp.eq.s32.totalorder %s23, 0
      %p106 = por %p104, %p105
      %p107 = scmp.ne.s32.totalorder %s99, %s101
      %p108 = scmp.eq.s32.totalorder %s28, 1
      %p109 = por %p107, %p108
      %p110 = scmp.ne.s32.totalorder %s101, %s102
      %p111 = scmp.eq.s32.totalorder %s28, 0
      %p112 = por %p110, %p111
      %p113 = scmp.ne.s32.totalorder %s101, %s102
      %p114 = scmp.eq.s32.totalorder %s29, 1
      %p115 = por %p113, %p114
      %p117 = scmp.ne.s32.totalorder %s102, %s116
      %p118 = scmp.eq.s32.totalorder %s29, 0
      %p119 = por %p117, %p118
      %s121 = sadd.s32 %s120, 1
      %p124 = scmp.eq.s32.totalorder %s23, 1
      %p125 = scmp.ne.s32.totalorder %s120, %s122
      %p126 = scmp.eq.s32.totalorder %s23, 0
      %p127 = por %p125, %p126
      %p128 = scmp.ne.s32.totalorder %s120, %s122
      %p129 = scmp.eq.s32.totalorder %s28, 1
      %p130 = por %p128, %p129
      %p131 = scmp.ne.s32.totalorder %s122, %s123
      %p132 = scmp.eq.s32.totalorder %s28, 0
      %p133 = por %p131, %p132
      %p134 = scmp.ne.s32.totalorder %s122, %s123
      %p135 = scmp.eq.s32.totalorder %s29, 1
      %p136 = por %p134, %p135
      %p138 = scmp.ne.s32.totalorder %s123, %s137
      %p139 = scmp.eq.s32.totalorder %s29, 0
      %p140 = por %p138, %p139
      %s142 = sadd.s32 %s141, 1
      %p145 = scmp.eq.s32.totalorder %s23, 1
      %p146 = scmp.ne.s32.totalorder %s141, %s143
      %p147 = scmp.eq.s32.totalorder %s23, 0
      %p148 = por %p146, %p147
      %p149 = scmp.ne.s32.totalorder %s141, %s143
      %p150 = scmp.eq.s32.totalorder %s28, 1
      %p151 = por %p149, %p150
      %p152 = scmp.ne.s32.totalorder %s143, %s144
      %p153 = scmp.eq.s32.totalorder %s28, 0
      %p154 = por %p152, %p153
      %p155 = scmp.ne.s32.totalorder %s143, %s144
      %p156 = scmp.eq.s32.totalorder %s29, 1
      %p157 = por %p155, %p156
      %p159 = scmp.ne.s32.totalorder %s144, %s158
      %p160 = scmp.eq.s32.totalorder %s29, 0
      %p161 = por %p159, %p160
      %s163 = sadd.s32 %s162, 1
      %p166 = scmp.eq.s32.totalorder %s23, 1
      %p167 = scmp.ne.s32.totalorder %s162, %s164
      %p168 = scmp.eq.s32.totalorder %s23, 0
      %p169 = por %p167, %p168
      %p170 = scmp.ne.s32.totalorder %s162, %s164
      %p171 = scmp.eq.s32.totalorder %s28, 1
      %p172 = por %p170, %p171
      %p173 = scmp.ne.s32.totalorder %s164, %s165
      %p174 = scmp.eq.s32.totalorder %s28, 0
      %p175 = por %p173, %p174
      %p176 = scmp.ne.s32.totalorder %s164, %s165
      %p177 = scmp.eq.s32.totalorder %s29, 1
      %p178 = por %p176, %p177
      %p180 = scmp.ne.s32.totalorder %s165, %s179
      %p181 = scmp.eq.s32.totalorder %s29, 0
      %p182 = por %p180, %p181
      %s184 = sadd.s32 %s183, 1
      %p187 = scmp.eq.s32.totalorder %s23, 1
      %p188 = scmp.ne.s32.totalorder %s183, %s185
      %p189 = scmp.eq.s32.totalorder %s23, 0
      %p190 = por %p188, %p189
      %p191 = scmp.ne.s32.totalorder %s183, %s185
      %p192 = scmp.eq.s32.totalorder %s28, 1
      %p193 = por %p191, %p192
      %p194 = scmp.ne.s32.totalorder %s185, %s186
      %p195 = scmp.eq.s32.totalorder %s28, 0
      %p196 = por %p194, %p195
      %p197 = scmp.ne.s32.totalorder %s185, %s186
      %p198 = scmp.eq.s32.totalorder %s29, 1
      %p199 = por %p197, %p198
      %p201 = scmp.ne.s32.totalorder %s186, %s200
      %p202 = scmp.eq.s32.totalorder %s29, 0
      %p203 = por %p201, %p202
      %s205 = sadd.s32 %s204, 1
      %p208 = scmp.eq.s32.totalorder %s23, 1
      %p209 = scmp.ne.s32.totalorder %s204, %s206
      %p210 = scmp.eq.s32.totalorder %s23, 0
      %p211 = por %p209, %p210
      %p212 = scmp.ne.s32.totalorder %s204, %s206
      %p213 = scmp.eq.s32.totalorder %s28, 1
      %p214 = por %p212, %p213
      %p215 = scmp.ne.s32.totalorder %s206, %s207
      %p216 = scmp.eq.s32.totalorder %s28, 0
      %p217 = por %p215, %p216
      %p218 = scmp.ne.s32.totalorder %s206, %s207
      %p219 = scmp.eq.s32.totalorder %s29, 1
      %p220 = por %p218, %p219
      %p222 = scmp.ne.s32.totalorder %s207, %s221
      %p223 = scmp.eq.s32.totalorder %s29, 0
      %p224 = por %p222, %p223
      %s226 = sadd.s32 %s225, 1
      %p229 = scmp.eq.s32.totalorder %s23, 1
      %p230 = scmp.ne.s32.totalorder %s225, %s227
      %p231 = scmp.eq.s32.totalorder %s23, 0
      %p232 = por %p230, %p231
      %p233 = scmp.ne.s32.totalorder %s225, %s227
      %p234 = scmp.eq.s32.totalorder %s28, 1
      %p235 = por %p233, %p234
      %p236 = scmp.ne.s32.totalorder %s227, %s228
      %p237 = scmp.eq.s32.totalorder %s28, 0
      %p238 = por %p236, %p237
      %p239 = scmp.ne.s32.totalorder %s227, %s228
      %p240 = scmp.eq.s32.totalorder %s29, 1
      %p241 = por %p239, %p240
      %p243 = scmp.ne.s32.totalorder %s228, %s242
      %p244 = scmp.eq.s32.totalorder %s29, 0
      %p245 = por %p243, %p244
      %s247 = sadd.s32 %s246, 1
      %p250 = scmp.eq.s32.totalorder %s23, 1
      %p251 = scmp.ne.s32.totalorder %s246, %s248
      %p252 = scmp.eq.s32.totalorder %s23, 0
      %p253 = por %p251, %p252
      %p254 = scmp.ne.s32.totalorder %s246, %s248
      %p255 = scmp.eq.s32.totalorder %s28, 1
      %p256 = por %p254, %p255
      %p257 = scmp.ne.s32.totalorder %s248, %s249
      %p258 = scmp.eq.s32.totalorder %s28, 0
      %p259 = por %p257, %p258
      %p260 = scmp.ne.s32.totalorder %s248, %s249
      %p261 = scmp.eq.s32.totalorder %s29, 1
      %p262 = por %p260, %p261
      %p264 = scmp.ne.s32.totalorder %s249, %s263
      %p265 = scmp.eq.s32.totalorder %s29, 0
      %p266 = por %p264, %p265
      %s268 = sadd.s32 %s267, 1
      %p271 = scmp.eq.s32.totalorder %s23, 1
      %p272 = scmp.ne.s32.totalorder %s267, %s269
      %p273 = scmp.eq.s32.totalorder %s23, 0
      %p274 = por %p272, %p273
      %p275 = scmp.ne.s32.totalorder %s267, %s269
      %p276 = scmp.eq.s32.totalorder %s28, 1
      %p277 = por %p275, %p276
      %p278 = scmp.ne.s32.totalorder %s269, %s270
      %p279 = scmp.eq.s32.totalorder %s28, 0
      %p280 = por %p278, %p279
      %p281 = scmp.ne.s32.totalorder %s269, %s270
      %p282 = scmp.eq.s32.totalorder %s29, 1
      %p283 = por %p281, %p282
      %p285 = scmp.ne.s32.totalorder %s270, %s284
      %p286 = scmp.eq.s32.totalorder %s29, 0
      %p287 = por %p285, %p286
      %s289 = sadd.s32 %s288, 1
      %p292 = scmp.eq.s32.totalorder %s23, 1
      %p293 = scmp.ne.s32.totalorder %s288, %s290
      %p294 = scmp.eq.s32.totalorder %s23, 0
      %p295 = por %p293, %p294
      %p296 = scmp.ne.s32.totalorder %s288, %s290
      %p297 = scmp.eq.s32.totalorder %s28, 1
      %p298 = por %p296, %p297
      %p299 = scmp.ne.s32.totalorder %s290, %s291
      %p300 = scmp.eq.s32.totalorder %s28, 0
      %p301 = por %p299, %p300
      %p302 = scmp.ne.s32.totalorder %s290, %s291
      %p303 = scmp.eq.s32.totalorder %s29, 1
      %p304 = por %p302, %p303
      %p306 = scmp.ne.s32.totalorder %s291, %s305
      %p307 = scmp.eq.s32.totalorder %s29, 0
      %p308 = por %p306, %p307
      %s310 = sadd.s32 %s309, 1
      %p313 = scmp.eq.s32.totalorder %s23, 1
      %p314 = scmp.ne.s32.totalorder %s309, %s311
      %p315 = scmp.eq.s32.totalorder %s23, 0
      %p316 = por %p314, %p315
      %p317 = scmp.ne.s32.totalorder %s309, %s311
      %p318 = scmp.eq.s32.totalorder %s28, 1
      %p319 = por %p317, %p318
      %p320 = scmp.ne.s32.totalorder %s311, %s312
      %p321 = scmp.eq.s32.totalorder %s28, 0
      %p322 = por %p320, %p321
      %p323 = scmp.ne.s32.totalorder %s311, %s312
      %p324 = scmp.eq.s32.totalorder %s29, 1
      %p325 = por %p323, %p324
      %p327 = scmp.ne.s32.totalorder %s312, %s326
      %p328 = scmp.eq.s32.totalorder %s29, 0
      %p329 = por %p327, %p328
      %s330 = ssub.s32 %s23, %s30
      %p331 = scmp.eq.s32.totalorder %s330, 0
      %s333 = sadd.s32 %s332, 1
      %s334 = scalar_select %p331, %s332, %s333
      %p337 = pneg %p331
      %p338 = scmp.eq.s32.totalorder %s23, 1
      %p339 = por %p337, %p338
      %p340 = scmp.ne.s32.totalorder %s332, %s335
      %p341 = scmp.eq.s32.totalorder %s23, 0
      %p342 = por %p340, %p341
      %p343 = scmp.ne.s32.totalorder %s332, %s335
      %p344 = scmp.eq.s32.totalorder %s28, 1
      %p345 = por %p343, %p344
      %p346 = scmp.ne.s32.totalorder %s335, %s336
      %p347 = scmp.eq.s32.totalorder %s28, 0
      %p348 = por %p346, %p347
      %p349 = scmp.ne.s32.totalorder %s335, %s336
      %p350 = scmp.eq.s32.totalorder %s29, 1
      %p351 = por %p349, %p350
      %p353 = scmp.ne.s32.totalorder %s336, %s352
      %p354 = scmp.eq.s32.totalorder %s29, 0
      %p355 = por %p353, %p354
      %p356 = scmp.le.s32.totalorder 1, %s23
      %p357 = scmp.lt.s32.totalorder %s23, 3
      %p358 = pnand %p356, %p357
      %p359 = pneg %p358
      // Predicated region
      $region9: #{tpu_custom_call.1} parent=5 // pred_check
        _
      $region10: #{tpu_custom_call.1} parent=5 // pred_check_branch
        %361 = sbr.rel (%p358) target = $region12
      $region11: #{tpu_custom_call.1} parent=5 // pred_region
        %s362 = ssub.s32 %s23, 1
        // Predicated region
        $region13: #{tpu_custom_call.1} parent=11 // pred_check
          %p363 = pneg %p70
        $region14: #{tpu_custom_call.1} parent=11 // pred_check_branch
          %365 = sbr.rel (%p363) target = $region16
        $region15: #{tpu_custom_call.1} parent=11 // pred_region
          _
        $region16: #{tpu_custom_call.1} parent=11 // pred_fallthru
          _
        // Predicated region
        $region17: #{tpu_custom_call.1} parent=11 // pred_check
          %p366 = pneg %p91
        $region18: #{tpu_custom_call.1} parent=11 // pred_check_branch
          %368 = sbr.rel (%p366) target = $region20
        $region19: #{tpu_custom_call.1} parent=11 // pred_region
          _
        $region20: #{tpu_custom_call.1} parent=11 // pred_fallthru
          _
        // Predicated region
        $region21: #{tpu_custom_call.1} parent=11 // pred_check
          %p369 = pneg %p112
        $region22: #{tpu_custom_call.1} parent=11 // pred_check_branch
          %371 = sbr.rel (%p369) target = $region24
        $region23: #{tpu_custom_call.1} parent=11 // pred_region
          _
        $region24: #{tpu_custom_call.1} parent=11 // pred_fallthru
          _
        // Predicated region
        $region25: #{tpu_custom_call.1} parent=11 // pred_check
          %p372 = pneg %p133
        $region26: #{tpu_custom_call.1} parent=11 // pred_check_branch
          %374 = sbr.rel (%p372) target = $region28
        $region27: #{tpu_custom_call.1} parent=11 // pred_region
          _
        $region28: #{tpu_custom_call.1} parent=11 // pred_fallthru
          _
        // Predicated region
        $region29: #{tpu_custom_call.1} parent=11 // pred_check
          %p375 = pneg %p154
        $region30: #{tpu_custom_call.1} parent=11 // pred_check_branch
          %377 = sbr.rel (%p375) target = $region32
        $region31: #{tpu_custom_call.1} parent=11 // pred_region
          _
        $region32: #{tpu_custom_call.1} parent=11 // pred_fallthru
          _
        // Predicated region
        $region33: #{tpu_custom_call.1} parent=11 // pred_check
          %p378 = pneg %p175
        $region34: #{tpu_custom_call.1} parent=11 // pred_check_branch
          %380 = sbr.rel (%p378) target = $region36
        $region35: #{tpu_custom_call.1} parent=11 // pred_region
          _
        $region36: #{tpu_custom_call.1} parent=11 // pred_fallthru
          _
        // Predicated region
        $region37: #{tpu_custom_call.1} parent=11 // pred_check
          %p381 = pneg %p196
        $region38: #{tpu_custom_call.1} parent=11 // pred_check_branch
          %383 = sbr.rel (%p381) target = $region40
        $region39: #{tpu_custom_call.1} parent=11 // pred_region
          _
        $region40: #{tpu_custom_call.1} parent=11 // pred_fallthru
          _
        // Predicated region
        $region41: #{tpu_custom_call.1} parent=11 // pred_check
          %p384 = pneg %p217
        $region42: #{tpu_custom_call.1} parent=11 // pred_check_branch
          %386 = sbr.rel (%p384) target = $region44
        $region43: #{tpu_custom_call.1} parent=11 // pred_region
          _
        $region44: #{tpu_custom_call.1} parent=11 // pred_fallthru
          _
        // Predicated region
        $region45: #{tpu_custom_call.1} parent=11 // pred_check
          %p387 = pneg %p238
        $region46: #{tpu_custom_call.1} parent=11 // pred_check_branch
          %389 = sbr.rel (%p387) target = $region48
        $region47: #{tpu_custom_call.1} parent=11 // pred_region
          _
        $region48: #{tpu_custom_call.1} parent=11 // pred_fallthru
          _
        // Predicated region
        $region49: #{tpu_custom_call.1} parent=11 // pred_check
          %p390 = pneg %p259
        $region50: #{tpu_custom_call.1} parent=11 // pred_check_branch
          %392 = sbr.rel (%p390) target = $region52
        $region51: #{tpu_custom_call.1} parent=11 // pred_region
          _
        $region52: #{tpu_custom_call.1} parent=11 // pred_fallthru
          _
        // Predicated region
        $region53: #{tpu_custom_call.1} parent=11 // pred_check
          %p393 = pneg %p280
        $region54: #{tpu_custom_call.1} parent=11 // pred_check_branch
          %395 = sbr.rel (%p393) target = $region56
        $region55: #{tpu_custom_call.1} parent=11 // pred_region
          _
        $region56: #{tpu_custom_call.1} parent=11 // pred_fallthru
          _
        // Predicated region
        $region57: #{tpu_custom_call.1} parent=11 // pred_check
          %p396 = pneg %p301
        $region58: #{tpu_custom_call.1} parent=11 // pred_check_branch
          %398 = sbr.rel (%p396) target = $region60
        $region59: #{tpu_custom_call.1} parent=11 // pred_region
          _
        $region60: #{tpu_custom_call.1} parent=11 // pred_fallthru
          _
        // Predicated region
        $region61: #{tpu_custom_call.1} parent=11 // pred_check
          %p399 = pneg %p322
        $region62: #{tpu_custom_call.1} parent=11 // pred_check_branch
          %401 = sbr.rel (%p399) target = $region64
        $region63: #{tpu_custom_call.1} parent=11 // pred_region
          _
        $region64: #{tpu_custom_call.1} parent=11 // pred_fallthru
          _
      $region12: #{tpu_custom_call.1} parent=5 // pred_fallthru
        _
      %p402 = scmp.lt.s32.totalorder %s23, 2
      // Predicated region
      $region65: #{tpu_custom_call.1} parent=5 // pred_check
        %p403 = pneg %p402
      $region66: #{tpu_custom_call.1} parent=5 // pred_check_branch
        %405 = sbr.rel (%p403) target = $region68
      $region67: #{tpu_custom_call.1} parent=5 // pred_region
        // Predicated region
        $region69: #{tpu_custom_call.1} parent=67 // pred_check
          %p406 = pneg %p43
        $region70: #{tpu_custom_call.1} parent=67 // pred_check_branch
          %408 = sbr.rel (%p406) target = $region72
        $region71: #{tpu_custom_call.1} parent=67 // pred_region
          %p409 = scmp.lt.s32.totalorder %s23, 1
          %s410 = scalar_select %p409, %s23, 1
          %s411 = smul.addr %s410, 8
          %s412 = scalar_lea.vmem %s0, %s411
        $region72: #{tpu_custom_call.1} parent=67 // pred_fallthru
          _
      $region68: #{tpu_custom_call.1} parent=5 // pred_fallthru
        _
      %p413 = scmp.le.s32.totalorder 1, %s23
      %p414 = scmp.lt.s32.totalorder %s23, 3
      %p415 = pnand %p413, %p414
      %p416 = pneg %p415
      // Predicated region
      $region73: #{tpu_custom_call.1} parent=5 // pred_check
        _
      $region74: #{tpu_custom_call.1} parent=5 // pred_check_branch
        %418 = sbr.rel (%p415) target = $region76
      $region75: #{tpu_custom_call.1} parent=5 // pred_region
        %s419 = ssub.s32 %s23, 1
        %p420 = scmp.lt.s32.totalorder %s28, 1
        %s421 = scalar_select %p420, %s28, 1
        %s422 = smul.addr %s421, 8
        %s423 = scalar_lea.vmem %s0, %s422
        %p424 = pneg %p49
        %p425 = pneg %p46
        %p426 = pneg %p70
        %p427 = pneg %p67
        %p428 = pneg %p91
        %p429 = pneg %p88
        %p430 = pneg %p112
        %p431 = pneg %p109
        %p432 = pneg %p133
        %p433 = pneg %p130
        %p434 = pneg %p154
        %p435 = pneg %p151
        %p436 = pneg %p175
        %p437 = pneg %p172
        %p438 = pneg %p196
        %p439 = pneg %p193
        %p440 = pneg %p217
        %p441 = pneg %p214
        %p442 = pneg %p238
        %p443 = pneg %p235
        %p444 = pneg %p259
        %p445 = pneg %p256
        %p446 = pneg %p280
        %p447 = pneg %p277
        %p448 = pneg %p301
        %p449 = pneg %p298
        %p450 = pneg %p322
        %p451 = pneg %p319
        %p452 = pneg %p348
        %p453 = pneg %p345
        %s454 = sand.u32 %s335, 1
        %s455 = scalar_lea.sflag [#allocation3], %s454
        %s456 = sand.u32 %s335, 1
        %s457 = smul.addr %s456, 16
        %s458 = scalar_lea.vmem [#allocation2], %s457
        %p459 = scmp.lt.s32.totalorder %s28, 1
        %s460 = scalar_select %p459, %s28, 1
        %s461 = smul.addr %s460, 8
        %s462 = scalar_lea.vmem %s0, %s461
        %v463 = vld [vmem:[%s462] sm:$0x1f]
        %v464 = vmul.f32 %v463, %v463
        %v466 = vrot.slane %v464, 1
        %v468 = vadd.f32 %v464, %v466
        %v469 = vrsqrt.pop %v468
        %v470 = vmul.f32 %v468, %v469
        %vm471 = vcmp.eq.f32.partialorder %v468, inf
        %v472 = vsel %vm471, %v468, %v470
        %vm473 = vcmp.eq.f32.partialorder %v468, 0.0
        %v474 = vand.u32 %v468, 2147483648
        %v475 = vsel %vm473, %v474, %v472
        %v476 = vmul.f32 %v463, 2.0
        %v478 = vrot.slane %v463, 7
        %v480 = vsub.f32 %v463, %v478
        %v481 = vmax.f32 %v480, 1e-20
        %v483 = vrot.slane %v481, 1
        %v485 = vrcp.pop %v483
        %v486 = vmul.f32 %v476, %v485
        %v487 = vadd.f32 %v486, 1.0
        %v488 = vlog2.pop %v487
        %v489 = vmul.f32 %v488, 0.6931472
        %v490 = vmul.f32 %v489, 0.5
        %v492 = vrot.slane %v475, 4
        %v495 = vrot.slane %v490, 5
        %v497 = vrot.slane %v463, 6
        %vm499 = vcmask 1043456
        %v500 = vsel %vm499, %v463, %v492
        %vm501 = vcmask 1044480
        %v502 = vsel %vm501, %v500, %v495
        %vm503 = vcmask 1045504
        %v504 = vsel %vm503, %v502, %v497
        %v505 = vld [vmem:[%s1] ss:$2 sm:$0x3]
        %s506 = scalar_lea.vmem %s1, 1
        %v507 = vld [vmem:[%s506] ss:$2 sm:$0x3]
        %v508 = vlaneseq
        %v509 = vshrl.u32 %v508, 7
        %v510 = vadd.s32 %v509, 8
        %v511 = vlaneseq
        %v512 = vshrl.u32 %v511, 7
        %v513 = vsub.s32 0, %v512
        %v514 = vrot.slane %v505, %v513
        %v515 = vlaneseq
        %v516 = vshrl.u32 %v515, 7
        %v517 = vsub.s32 1, %v516
        %v518 = vrot.slane %v505, %v517
        %vm519 = vcmp.eq.s32.totalorder %v509, %v514
        %vm520 = vcmp.eq.s32.totalorder %v509, %v518
        %vm521 = vcmp.eq.s32.totalorder %v510, %v514
        %vm522 = vcmp.eq.s32.totalorder %v510, %v518
        %v523 = vsel %vm519, 1, 0
        %v524 = vsel %vm520, 1, 0
        %v525 = vsel %vm521, 1, 0
        %v526 = vsel %vm522, 1, 0
        %v527 = vcvt.s32.f32 %v523
        %v528 = vcvt.s32.f32 %v524
        %v529 = vcvt.s32.f32 %v525
        %v530 = vcvt.s32.f32 %v526
        %v531 = vlaneseq
        %v532 = vshrl.u32 %v531, 7
        %v533 = vsub.s32 0, %v532
        %v534 = vrot.slane %v507, %v533
        %v535 = vlaneseq
        %v536 = vshrl.u32 %v535, 7
        %v537 = vsub.s32 1, %v536
        %v538 = vrot.slane %v507, %v537
        %vm539 = vcmp.eq.s32.totalorder %v509, %v534
        %vm540 = vcmp.eq.s32.totalorder %v509, %v538
        %vm541 = vcmp.eq.s32.totalorder %v510, %v534
        %vm542 = vcmp.eq.s32.totalorder %v510, %v538
        %v543 = vsel %vm539, 1, 0
        %v544 = vsel %vm540, 1, 0
        %v545 = vsel %vm541, 1, 0
        %v546 = vsel %vm542, 1, 0
        %v547 = vcvt.s32.f32 %v543
        %v548 = vcvt.s32.f32 %v544
        %v549 = vcvt.s32.f32 %v545
        %v550 = vcvt.s32.f32 %v546
        %v551 = vpack.c.bf16 %v504, %v504
        %v552 = vunpack.c.l.bf16 %v551
        %v553 = vsub.f32 %v504, %v552
        %vm554 = vcmask 130048
        %v556 = vsel %vm554, %v553, 0
        %558 = vmatprep.subr.mxu0 %v528
        %559 = vmatpush1.msra.mxu0 %v527
        %560 = vmatprep.subr.mxu0 %v530
        %561 = vmatpush1.msra.mxu0 %v529
        %562 = vmatprep.subr.mxu0 0.0
        %563 = vmatpush1.msra.mxu0 0.0
        %564 = vmatprep.subr.mxu0 0.0
        %565 = vmatpush1.msra.mxu0 0.0
        %566 = vmatprep.subr.mxu0 0.0
        %567 = vmatpush1.msra.mxu0 0.0
        %568 = vmatprep.subr.mxu0 0.0
        %569 = vmatpush1.msra.mxu0 0.0
        %570 = vmatprep.subr.mxu0 0.0
        %571 = vmatpush1.msra.mxu0 0.0
        %572 = vmatprep.subr.mxu0 0.0
        %573 = vmatpush1.msra.mxu0 0.0
        %574 = vmatprep.subr.mxu0 0.0
        %575 = vmatpush1.msra.mxu0 0.0
        %576 = vmatprep.subr.mxu0 0.0
        %577 = vmatpush1.msra.mxu0 0.0
        %578 = vmatprep.subr.mxu0 0.0
        %579 = vmatpush1.msra.mxu0 0.0
        %580 = vmatprep.subr.mxu0 0.0
        %581 = vmatpush1.msra.mxu0 0.0
        %582 = vmatprep.subr.mxu0 0.0
        %583 = vmatpush1.msra.mxu0 0.0
        %584 = vmatprep.subr.mxu0 0.0
        %585 = vmatpush1.msra.mxu0 0.0
        %586 = vmatprep.subr.mxu0 0.0
        %587 = vmatpush1.msra.mxu0 0.0
        %588 = vmatprep.subr.mxu0 0.0
        %589 = vmatpush1.msra.mxu0 0.0
        %590 = vmatprep.subr.mxu0 0.0
        %591 = vmatpush1.msra.mxu0 0.0
        %592 = vmatprep.subr.mxu0 0.0
        %593 = vmatpush1.msra.mxu0 0.0
        %594 = vmatprep.subr.mxu0 0.0
        %595 = vmatpush1.msra.mxu0 0.0
        %596 = vmatprep.subr.mxu0 0.0
        %597 = vmatpush1.msra.mxu0 0.0
        %598 = vmatprep.subr.mxu0 0.0
        %599 = vmatpush1.msra.mxu0 0.0
        %600 = vmatprep.subr.mxu0 0.0
        %601 = vmatpush1.msra.mxu0 0.0
        %602 = vmatprep.subr.mxu0 0.0
        %603 = vmatpush1.msra.mxu0 0.0
        %604 = vmatprep.subr.mxu0 0.0
        %605 = vmatpush1.msra.mxu0 0.0
        %606 = vmatprep.subr.mxu0 0.0
        %607 = vmatpush1.msra.mxu0 0.0
        %608 = vmatprep.subr.mxu0 0.0
        %609 = vmatpush1.msra.mxu0 0.0
        %610 = vmatprep.subr.mxu0 0.0
        %611 = vmatpush1.msra.mxu0 0.0
        %612 = vmatprep.subr.mxu0 0.0
        %613 = vmatpush1.msra.mxu0 0.0
        %614 = vmatprep.subr.mxu0 0.0
        %615 = vmatpush1.msra.mxu0 0.0
        %616 = vmatprep.subr.mxu0 0.0
        %617 = vmatpush1.msra.mxu0 0.0
        %618 = vmatprep.subr.mxu0 0.0
        %619 = vmatpush1.msra.mxu0 0.0
        %620 = vmatprep.subr.mxu0 0.0
        %621 = vmatpush1.msra.mxu0 0.0
        %622 = vmatprep.mubr.f32.mxu0 0.0
        %623 = vmatmul.mubr.f32.gmra.mrb[0].mxu0 %v556
        %v624 = vpop.f32.mrb[0].mxu0
        %v625 = vadd.f32 0.0, %v624
        %v626 = vpop.f32.mrb[0].mxu0
        %v627 = vadd.f32 0.0, %v626
        %628 = vdwg.mxu0
        %v630 = vsel %vm554, %v552, 0
        %632 = vmatprep.subr.mxu0 %v528
        %633 = vmatpush1.msra.mxu0 %v527
        %634 = vmatprep.subr.mxu0 %v530
        %635 = vmatpush1.msra.mxu0 %v529
        %636 = vmatprep.subr.mxu0 0.0
        %637 = vmatpush1.msra.mxu0 0.0
        %638 = vmatprep.subr.mxu0 0.0
        %639 = vmatpush1.msra.mxu0 0.0
        %640 = vmatprep.subr.mxu0 0.0
        %641 = vmatpush1.msra.mxu0 0.0
        %642 = vmatprep.subr.mxu0 0.0
        %643 = vmatpush1.msra.mxu0 0.0
        %644 = vmatprep.subr.mxu0 0.0
        %645 = vmatpush1.msra.mxu0 0.0
        %646 = vmatprep.subr.mxu0 0.0
        %647 = vmatpush1.msra.mxu0 0.0
        %648 = vmatprep.subr.mxu0 0.0
        %649 = vmatpush1.msra.mxu0 0.0
        %650 = vmatprep.subr.mxu0 0.0
        %651 = vmatpush1.msra.mxu0 0.0
        %652 = vmatprep.subr.mxu0 0.0
        %653 = vmatpush1.msra.mxu0 0.0
        %654 = vmatprep.subr.mxu0 0.0
        %655 = vmatpush1.msra.mxu0 0.0
        %656 = vmatprep.subr.mxu0 0.0
        %657 = vmatpush1.msra.mxu0 0.0
        %658 = vmatprep.subr.mxu0 0.0
        %659 = vmatpush1.msra.mxu0 0.0
        %660 = vmatprep.subr.mxu0 0.0
        %661 = vmatpush1.msra.mxu0 0.0
        %662 = vmatprep.subr.mxu0 0.0
        %663 = vmatpush1.msra.mxu0 0.0
        %664 = vmatprep.subr.mxu0 0.0
        %665 = vmatpush1.msra.mxu0 0.0
        %666 = vmatprep.subr.mxu0 0.0
        %667 = vmatpush1.msra.mxu0 0.0
        %668 = vmatprep.subr.mxu0 0.0
        %669 = vmatpush1.msra.mxu0 0.0
        %670 = vmatprep.subr.mxu0 0.0
        %671 = vmatpush1.msra.mxu0 0.0
        %672 = vmatprep.subr.mxu0 0.0
        %673 = vmatpush1.msra.mxu0 0.0
        %674 = vmatprep.subr.mxu0 0.0
        %675 = vmatpush1.msra.mxu0 0.0
        %676 = vmatprep.subr.mxu0 0.0
        %677 = vmatpush1.msra.mxu0 0.0
        %678 = vmatprep.subr.mxu0 0.0
        %679 = vmatpush1.msra.mxu0 0.0
        %680 = vmatprep.subr.mxu0 0.0
        %681 = vmatpush1.msra.mxu0 0.0
        %682 = vmatprep.subr.mxu0 0.0
        %683 = vmatpush1.msra.mxu0 0.0
        %684 = vmatprep.subr.mxu0 0.0
        %685 = vmatpush1.msra.mxu0 0.0
        %686 = vmatprep.subr.mxu0 0.0
        %687 = vmatpush1.msra.mxu0 0.0
        %688 = vmatprep.subr.mxu0 0.0
        %689 = vmatpush1.msra.mxu0 0.0
        %690 = vmatprep.subr.mxu0 0.0
        %691 = vmatpush1.msra.mxu0 0.0
        %692 = vmatprep.subr.mxu0 0.0
        %693 = vmatpush1.msra.mxu0 0.0
        %694 = vmatprep.subr.mxu0 0.0
        %695 = vmatpush1.msra.mxu0 0.0
        %696 = vmatprep.mubr.f32.mxu0 0.0
        %697 = vmatmul.mubr.f32.gmra.mrb[0].mxu0 %v630
        %v698 = vpop.f32.mrb[0].mxu0
        %v699 = vadd.f32 %v625, %v698
        %v700 = vpop.f32.mrb[0].mxu0
        %v701 = vadd.f32 %v627, %v700
        %702 = vdwg.mxu0
        %703 = vmatprep.subr.mxu0 %v548
        %704 = vmatpush1.msra.mxu0 %v547
        %705 = vmatprep.subr.mxu0 %v550
        %706 = vmatpush1.msra.mxu0 %v549
        %707 = vmatprep.subr.mxu0 0.0
        %708 = vmatpush1.msra.mxu0 0.0
        %709 = vmatprep.subr.mxu0 0.0
        %710 = vmatpush1.msra.mxu0 0.0
        %711 = vmatprep.subr.mxu0 0.0
        %712 = vmatpush1.msra.mxu0 0.0
        %713 = vmatprep.subr.mxu0 0.0
        %714 = vmatpush1.msra.mxu0 0.0
        %715 = vmatprep.subr.mxu0 0.0
        %716 = vmatpush1.msra.mxu0 0.0
        %717 = vmatprep.subr.mxu0 0.0
        %718 = vmatpush1.msra.mxu0 0.0
        %719 = vmatprep.subr.mxu0 0.0
        %720 = vmatpush1.msra.mxu0 0.0
        %721 = vmatprep.subr.mxu0 0.0
        %722 = vmatpush1.msra.mxu0 0.0
        %723 = vmatprep.subr.mxu0 0.0
        %724 = vmatpush1.msra.mxu0 0.0
        %725 = vmatprep.subr.mxu0 0.0
        %726 = vmatpush1.msra.mxu0 0.0
        %727 = vmatprep.subr.mxu0 0.0
        %728 = vmatpush1.msra.mxu0 0.0
        %729 = vmatprep.subr.mxu0 0.0
        %730 = vmatpush1.msra.mxu0 0.0
        %731 = vmatprep.subr.mxu0 0.0
        %732 = vmatpush1.msra.mxu0 0.0
        %733 = vmatprep.subr.mxu0 0.0
        %734 = vmatpush1.msra.mxu0 0.0
        %735 = vmatprep.subr.mxu0 0.0
        %736 = vmatpush1.msra.mxu0 0.0
        %737 = vmatprep.subr.mxu0 0.0
        %738 = vmatpush1.msra.mxu0 0.0
        %739 = vmatprep.subr.mxu0 0.0
        %740 = vmatpush1.msra.mxu0 0.0
        %741 = vmatprep.subr.mxu0 0.0
        %742 = vmatpush1.msra.mxu0 0.0
        %743 = vmatprep.subr.mxu0 0.0
        %744 = vmatpush1.msra.mxu0 0.0
        %745 = vmatprep.subr.mxu0 0.0
        %746 = vmatpush1.msra.mxu0 0.0
        %747 = vmatprep.subr.mxu0 0.0
        %748 = vmatpush1.msra.mxu0 0.0
        %749 = vmatprep.subr.mxu0 0.0
        %750 = vmatpush1.msra.mxu0 0.0
        %751 = vmatprep.subr.mxu0 0.0
        %752 = vmatpush1.msra.mxu0 0.0
        %753 = vmatprep.subr.mxu0 0.0
        %754 = vmatpush1.msra.mxu0 0.0
        %755 = vmatprep.subr.mxu0 0.0
        %756 = vmatpush1.msra.mxu0 0.0
        %757 = vmatprep.subr.mxu0 0.0
        %758 = vmatpush1.msra.mxu0 0.0
        %759 = vmatprep.subr.mxu0 0.0
        %760 = vmatpush1.msra.mxu0 0.0
        %761 = vmatprep.subr.mxu0 0.0
        %762 = vmatpush1.msra.mxu0 0.0
        %763 = vmatprep.subr.mxu0 0.0
        %764 = vmatpush1.msra.mxu0 0.0
        %765 = vmatprep.subr.mxu0 0.0
        %766 = vmatpush1.msra.mxu0 0.0
        %767 = vmatprep.mubr.f32.mxu0 0.0
        %768 = vmatmul.mubr.f32.gmra.mrb[0].mxu0 %v556
        %v769 = vpop.f32.mrb[0].mxu0
        %v770 = vadd.f32 0.0, %v769
        %v771 = vpop.f32.mrb[0].mxu0
        %v772 = vadd.f32 0.0, %v771
        %773 = vdwg.mxu0
        %774 = vmatprep.subr.mxu0 %v548
        %775 = vmatpush1.msra.mxu0 %v547
        %776 = vmatprep.subr.mxu0 %v550
        %777 = vmatpush1.msra.mxu0 %v549
        %778 = vmatprep.subr.mxu0 0.0
        %779 = vmatpush1.msra.mxu0 0.0
        %780 = vmatprep.subr.mxu0 0.0
        %781 = vmatpush1.msra.mxu0 0.0
        %782 = vmatprep.subr.mxu0 0.0
        %783 = vmatpush1.msra.mxu0 0.0
        %784 = vmatprep.subr.mxu0 0.0
        %785 = vmatpush1.msra.mxu0 0.0
        %786 = vmatprep.subr.mxu0 0.0
        %787 = vmatpush1.msra.mxu0 0.0
        %788 = vmatprep.subr.mxu0 0.0
        %789 = vmatpush1.msra.mxu0 0.0
        %790 = vmatprep.subr.mxu0 0.0
        %791 = vmatpush1.msra.mxu0 0.0
        %792 = vmatprep.subr.mxu0 0.0
        %793 = vmatpush1.msra.mxu0 0.0
        %794 = vmatprep.subr.mxu0 0.0
        %795 = vmatpush1.msra.mxu0 0.0
        %796 = vmatprep.subr.mxu0 0.0
        %797 = vmatpush1.msra.mxu0 0.0
        %798 = vmatprep.subr.mxu0 0.0
        %799 = vmatpush1.msra.mxu0 0.0
        %800 = vmatprep.subr.mxu0 0.0
        %801 = vmatpush1.msra.mxu0 0.0
        %802 = vmatprep.subr.mxu0 0.0
        %803 = vmatpush1.msra.mxu0 0.0
        %804 = vmatprep.subr.mxu0 0.0
        %805 = vmatpush1.msra.mxu0 0.0
        %806 = vmatprep.subr.mxu0 0.0
        %807 = vmatpush1.msra.mxu0 0.0
        %808 = vmatprep.subr.mxu0 0.0
        %809 = vmatpush1.msra.mxu0 0.0
        %810 = vmatprep.subr.mxu0 0.0
        %811 = vmatpush1.msra.mxu0 0.0
        %812 = vmatprep.subr.mxu0 0.0
        %813 = vmatpush1.msra.mxu0 0.0
        %814 = vmatprep.subr.mxu0 0.0
        %815 = vmatpush1.msra.mxu0 0.0
        %816 = vmatprep.subr.mxu0 0.0
        %817 = vmatpush1.msra.mxu0 0.0
        %818 = vmatprep.subr.mxu0 0.0
        %819 = vmatpush1.msra.mxu0 0.0
        %820 = vmatprep.subr.mxu0 0.0
        %821 = vmatpush1.msra.mxu0 0.0
        %822 = vmatprep.subr.mxu0 0.0
        %823 = vmatpush1.msra.mxu0 0.0
        %824 = vmatprep.subr.mxu0 0.0
        %825 = vmatpush1.msra.mxu0 0.0
        %826 = vmatprep.subr.mxu0 0.0
        %827 = vmatpush1.msra.mxu0 0.0
        %828 = vmatprep.subr.mxu0 0.0
        %829 = vmatpush1.msra.mxu0 0.0
        %830 = vmatprep.subr.mxu0 0.0
        %831 = vmatpush1.msra.mxu0 0.0
        %832 = vmatprep.subr.mxu0 0.0
        %833 = vmatpush1.msra.mxu0 0.0
        %834 = vmatprep.subr.mxu0 0.0
        %835 = vmatpush1.msra.mxu0 0.0
        %836 = vmatprep.subr.mxu0 0.0
        %837 = vmatpush1.msra.mxu0 0.0
        %838 = vmatprep.mubr.f32.mxu0 0.0
        %839 = vmatmul.mubr.f32.gmra.mrb[0].mxu0 %v630
        %v840 = vpop.f32.mrb[0].mxu0
        %v841 = vadd.f32 %v770, %v840
        %v842 = vpop.f32.mrb[0].mxu0
        %v843 = vadd.f32 %v772, %v842
        %844 = vdwg.mxu0
        %v845 = vsub.f32 %v699, %v841
        %v846 = vsub.f32 %v701, %v843
        %v847 = vadd.f32 %v845, 3.1415927
        %v848 = vadd.f32 %v846, 3.1415927
        %v849 = vrcp.pop 6.2831855
        %v850 = vmul.f32 %v847, %v849
        %v851 = vmul.f32 %v848, %v849
        %v852 = vfloor.f32 %v850
        %v853 = vfloor.f32 %v851
        %v854 = vmul.f32 %v852, 6.2831855
        %v855 = vmul.f32 %v853, 6.2831855
        %v856 = vsub.f32 %v847, %v854
        %v857 = vsub.f32 %v848, %v855
        %v858 = vsub.f32 %v856, 3.1415927
        %v859 = vsub.f32 %v857, 3.1415927
        %v860 = vmul.f32 %v845, %v845
        %v861 = vmul.f32 %v846, %v846
        %v862 = vmul.f32 %v858, %v858
        %v863 = vmul.f32 %v859, %v859
        %v866 = vrot.slane %v862, 1
        %v867 = vrot.slane %v863, 1
        %v870 = vadd.f32 %v860, %v866
        %v871 = vadd.f32 %v861, %v867
        %v872 = vrsqrt.pop %v870
        %v873 = vmul.f32 %v870, %v872
        %vm874 = vcmp.eq.f32.partialorder %v870, inf
        %v875 = vsel %vm874, %v870, %v873
        %vm876 = vcmp.eq.f32.partialorder %v870, 0.0
        %v877 = vand.u32 %v870, 2147483648
        %v878 = vsel %vm876, %v877, %v875
        %v879 = vrsqrt.pop %v871
        %v880 = vmul.f32 %v871, %v879
        %vm881 = vcmp.eq.f32.partialorder %v871, inf
        %v882 = vsel %vm881, %v871, %v880
        %vm883 = vcmp.eq.f32.partialorder %v871, 0.0
        %v884 = vand.u32 %v871, 2147483648
        %v885 = vsel %vm883, %v884, %v882
        %v886 = vmax.f32 %v878, 1e-08
        %v887 = vmax.f32 %v885, 1e-08
        %v888 = vadd.f32 %v886, 1.0
        %v889 = vadd.f32 %v887, 1.0
        %v890 = vlog2.pop %v888
        %v891 = vmul.f32 %v890, 0.6931472
        %v892 = vlog2.pop %v889
        %v893 = vmul.f32 %v892, 0.6931472
        %v894 = vmin.f32 %v699, %v841
        %v895 = vmin.f32 %v701, %v843
        %v898 = vrot.slane %v878, 1
        %v899 = vrot.slane %v885, 1
        %v902 = vmul.f32 %v894, %v898
        %v903 = vmul.f32 %v895, %v899
        %v904 = vmax.f32 %v902, 1e-08
        %v905 = vmax.f32 %v903, 1e-08
        %v906 = vadd.f32 %v904, 1.0
        %v907 = vadd.f32 %v905, 1.0
        %v908 = vlog2.pop %v906
        %v909 = vmul.f32 %v908, 0.6931472
        %v910 = vlog2.pop %v907
        %v911 = vmul.f32 %v910, 0.6931472
        %v912 = vadd.f32 %v699, %v841
        %v913 = vadd.f32 %v701, %v843
        %v914 = vmax.f32 %v912, 1e-08
        %v915 = vmax.f32 %v913, 1e-08
        %v916 = vrcp.pop %v914
        %v917 = vmul.f32 %v894, %v916
        %v918 = vrcp.pop %v915
        %v919 = vmul.f32 %v895, %v918
        %v920 = vmax.f32 %v917, 1e-08
        %v921 = vmax.f32 %v919, 1e-08
        %v922 = vadd.f32 %v920, 1.0
        %v923 = vadd.f32 %v921, 1.0
        %v924 = vlog2.pop %v922
        %v925 = vmul.f32 %v924, 0.6931472
        %v926 = vlog2.pop %v923
        %v927 = vmul.f32 %v926, 0.6931472
        %v928 = vmul.f32 %v912, %v912
        %v929 = vmul.f32 %v913, %v913
        %v932 = vrot.slane %v928, 1
        %v933 = vrot.slane %v929, 1
        %v936 = vadd.f32 %v928, %v932
        %v937 = vadd.f32 %v929, %v933
        %v938 = vrot.slane %v928, 2
        %v939 = vrot.slane %v929, 2
        %v942 = vadd.f32 %v936, %v938
        %v943 = vadd.f32 %v937, %v939
        %v946 = vrot.slane %v942, 5
        %v947 = vrot.slane %v943, 5
        %v950 = vsub.f32 %v928, %v946
        %v951 = vsub.f32 %v929, %v947
        %v952 = vmax.f32 %v950, 1e-08
        %v953 = vmax.f32 %v951, 1e-08
        %v954 = vadd.f32 %v952, 1.0
        %v955 = vadd.f32 %v953, 1.0
        %v956 = vlog2.pop %v954
        %v957 = vmul.f32 %v956, 0.6931472
        %v958 = vlog2.pop %v955
        %v959 = vmul.f32 %v958, 0.6931472
        %vm960 = vcmp.ne.f32.partialorder %v699, 0.0
        %vm961 = vcmp.ne.f32.partialorder %v701, 0.0
        %vm962 = vcmp.ne.f32.partialorder %v841, 0.0
        %vm963 = vcmp.ne.f32.partialorder %v843, 0.0
        %vm964 = vmand %vm960, %vm962
        %vm965 = vmand %vm961, %vm963
        %v966 = vsel %vm964, 1, 0
        %v967 = vsel %vm965, 1, 0
        %v968 = vcvt.s32.f32 %v966
        %v969 = vcvt.s32.f32 %v967
        %v972 = vrot.slane %v909, 4
        %v973 = vrot.slane %v911, 4
        %v978 = vrot.slane %v925, 3
        %v979 = vrot.slane %v927, 3
        %v984 = vrot.slane %v891, 3
        %v985 = vrot.slane %v893, 3
        %vm988 = vcmask 1040384
        %v989 = vsel %vm988, %v972, %v978
        %v990 = vsel %vm988, %v973, %v979
        %vm991 = vcmask 1041408
        %v992 = vsel %vm991, %v989, %v984
        %v993 = vsel %vm991, %v990, %v985
        %vm994 = vcmask 1042432
        %v995 = vsel %vm994, %v992, %v957
        %v996 = vsel %vm994, %v993, %v959
        %v997 = vlaneseq
        %v998 = vshrl.u32 %v997, 7
        %v999 = vsub.s32 4, %v998
        %v1000 = vrot.slane %v968, %v999
        %v1001 = vlaneseq
        %v1002 = vshrl.u32 %v1001, 7
        %v1003 = vsub.s32 4, %v1002
        %v1004 = vrot.slane %v969, %v1003
        %v1005 = vmul.f32 %v995, %v1000
        %v1006 = vmul.f32 %v996, %v1004
        %v1007 = vld [vmem:[%s2] sm:$0xf]
        %1009 = vset.pattern.permute.xlu0 0
        %1010 = vperm.xlu0 %1009, %v1007
        %v1011 = vpop.permute.xlu0 %1010
        %v1013 = vmul.f32 %v1005, %v1011
        %v1014 = vmul.f32 %v1006, %v1011
        %v1015 = vld [vmem:[%s3] sm:$0xf]
        %1017 = vset.pattern.permute.xlu0 0
        %1018 = vperm.xlu0 %1017, %v1015
        %v1019 = vpop.permute.xlu0 %1018
        %v1021 = vadd.f32 %v1013, %v1019
        %v1022 = vadd.f32 %v1014, %v1019
        %v1023 = vmul.f32 %v1021, 0.5
        %v1024 = vmul.f32 %v1022, 0.5
        %v1025 = vmul.f32 %v1021, 0.70710677
        %v1026 = vmul.f32 %v1022, 0.70710677
        %vm1027 = vcmp.lt.f32.partialorder %v1025, 0.0
        %vm1028 = vcmp.lt.f32.partialorder %v1026, 0.0
        %v1029 = vsel %vm1027, -1.0, 1.0
        %v1030 = vsel %vm1028, -1.0, 1.0
        %v1031 = vand.u32 2147483647, %v1025
        %v1032 = vand.u32 2147483647, %v1026
        %v1033 = vmul.f32 %v1031, 0.3275911
        %v1034 = vmul.f32 %v1032, 0.3275911
        %v1035 = vadd.f32 %v1033, 1.0
        %v1036 = vadd.f32 %v1034, 1.0
        %v1037 = vrcp.pop %v1035
        %v1038 = vmul.f32 1.0, %v1037
        %v1039 = vrcp.pop %v1036
        %v1040 = vmul.f32 1.0, %v1039
        %v1041 = vmul.f32 %v1038, 1.0614054
        %v1042 = vmul.f32 %v1040, 1.0614054
        %v1043 = vadd.f32 %v1041, -1.4531521
        %v1044 = vadd.f32 %v1042, -1.4531521
        %v1045 = vmul.f32 %v1038, %v1043
        %v1046 = vmul.f32 %v1040, %v1044
        %v1047 = vadd.f32 %v1045, 1.4214138
        %v1048 = vadd.f32 %v1046, 1.4214138
        %v1049 = vmul.f32 %v1038, %v1047
        %v1050 = vmul.f32 %v1040, %v1048
        %v1051 = vadd.f32 %v1049, -0.28449672
        %v1052 = vadd.f32 %v1050, -0.28449672
        %v1053 = vmul.f32 %v1038, %v1051
        %v1054 = vmul.f32 %v1040, %v1052
        %v1055 = vadd.f32 %v1053, 0.2548296
        %v1056 = vadd.f32 %v1054, 0.2548296
        %v1057 = vmul.f32 %v1038, %v1055
        %v1058 = vmul.f32 %v1040, %v1056
        %v1059 = vsub.f32 0.0, %v1031
        %v1060 = vsub.f32 0.0, %v1032
        %v1061 = vmul.f32 %v1059, %v1031
        %v1062 = vmul.f32 %v1060, %v1032
        %v1063 = vmul.f32 %v1061, 1.442695
        %v1064 = vpow.pop %v1063
        %v1065 = vmul.f32 %v1062, 1.442695
        %v1066 = vpow.pop %v1065
        %v1067 = vmul.f32 %v1057, %v1064
        %v1068 = vmul.f32 %v1058, %v1066
        %v1069 = vsub.f32 1.0, %v1067
        %v1070 = vsub.f32 1.0, %v1068
        %v1071 = vmul.f32 %v1029, %v1069
        %v1072 = vmul.f32 %v1030, %v1070
        %v1073 = vadd.f32 %v1071, 1.0
        %v1074 = vadd.f32 %v1072, 1.0
        %v1075 = vmul.f32 %v1023, %v1073
        %v1076 = vmul.f32 %v1024, %v1074
        %v1077 = vld [vmem:[%s4] sm:$0xff]
        %v1078 = vld [vmem:[%s4 + $0x8] sm:$0xff]
        %v1079 = vld [vmem:[%s4 + $0x10] sm:$0xff]
        %v1080 = vld [vmem:[%s4 + $0x18] sm:$0xff]
        %v1081 = vld [vmem:[%s5] sm:$0xff]
        %v1082 = vld [vmem:[%s5 + $0x8] sm:$0xff]
        %v1083 = vld [vmem:[%s5 + $0x10] sm:$0xff]
        %v1084 = vld [vmem:[%s5 + $0x18] sm:$0xff]
        %1086 = vset.pattern.permute.xlu0 0
        %1087 = vperm.xlu0 %1086, %v1081
        %v1088 = vpop.permute.xlu0 %1087
        %1091 = vset.pattern.permute.xlu0 0
        %1092 = vperm.xlu0 %1091, %v1082
        %v1093 = vpop.permute.xlu0 %1092
        %1096 = vset.pattern.permute.xlu0 0
        %1097 = vperm.xlu0 %1096, %v1083
        %v1098 = vpop.permute.xlu0 %1097
        %1101 = vset.pattern.permute.xlu0 0
        %1102 = vperm.xlu0 %1101, %v1084
        %v1103 = vpop.permute.xlu0 %1102
        %vm1105 = vcmask 31744
        %v1107 = vsel %vm1105, %v1077, 0
        %v1110 = vsel %vm1105, %v1078, 0
        %v1113 = vsel %vm1105, %v1079, 0
        %v1116 = vsel %vm1105, %v1080, 0
        %v1119 = vsel %vm499, %v1075, 0
        %v1122 = vsel %vm499, %v1076, 0
        %1124 = vmatprep.subr.mxu0 %v1122
        %1125 = vmatpush1.msra.mxu0 %v1119
        %1126 = vmatprep.subr.mxu0 0.0
        %1127 = vmatpush1.msra.mxu0 0.0
        %1128 = vmatprep.subr.mxu0 0.0
        %1129 = vmatpush1.msra.mxu0 0.0
        %1130 = vmatprep.subr.mxu0 0.0
        %1131 = vmatpush1.msra.mxu0 0.0
        %1132 = vmatprep.subr.mxu0 0.0
        %1133 = vmatpush1.msra.mxu0 0.0
        %1134 = vmatprep.subr.mxu0 0.0
        %1135 = vmatpush1.msra.mxu0 0.0
        %1136 = vmatprep.subr.mxu0 0.0
        %1137 = vmatpush1.msra.mxu0 0.0
        %1138 = vmatprep.subr.mxu0 0.0
        %1139 = vmatpush1.msra.mxu0 0.0
        %1140 = vmatprep.subr.mxu0 0.0
        %1141 = vmatpush1.msra.mxu0 0.0
        %1142 = vmatprep.subr.mxu0 0.0
        %1143 = vmatpush1.msra.mxu0 0.0
        %1144 = vmatprep.subr.mxu0 0.0
        %1145 = vmatpush1.msra.mxu0 0.0
        %1146 = vmatprep.subr.mxu0 0.0
        %1147 = vmatpush1.msra.mxu0 0.0
        %1148 = vmatprep.subr.mxu0 0.0
        %1149 = vmatpush1.msra.mxu0 0.0
        %1150 = vmatprep.subr.mxu0 0.0
        %1151 = vmatpush1.msra.mxu0 0.0
        %1152 = vmatprep.subr.mxu0 0.0
        %1153 = vmatpush1.msra.mxu0 0.0
        %1154 = vmatprep.subr.mxu0 0.0
        %1155 = vmatpush1.msra.mxu0 0.0
        %1156 = vmatprep.subr.mxu0 0.0
        %1157 = vmatpush1.msra.mxu0 0.0
        %1158 = vmatprep.subr.mxu0 0.0
        %1159 = vmatpush1.msra.mxu0 0.0
        %1160 = vmatprep.subr.mxu0 0.0
        %1161 = vmatpush1.msra.mxu0 0.0
        %1162 = vmatprep.subr.mxu0 0.0
        %1163 = vmatpush1.msra.mxu0 0.0
        %1164 = vmatprep.subr.mxu0 0.0
        %1165 = vmatpush1.msra.mxu0 0.0
        %1166 = vmatprep.subr.mxu0 0.0
        %1167 = vmatpush1.msra.mxu0 0.0
        %1168 = vmatprep.subr.mxu0 0.0
        %1169 = vmatpush1.msra.mxu0 0.0
        %1170 = vmatprep.subr.mxu0 0.0
        %1171 = vmatpush1.msra.mxu0 0.0
        %1172 = vmatprep.subr.mxu0 0.0
        %1173 = vmatpush1.msra.mxu0 0.0
        %1174 = vmatprep.subr.mxu0 0.0
        %1175 = vmatpush1.msra.mxu0 0.0
        %1176 = vmatprep.subr.mxu0 0.0
        %1177 = vmatpush1.msra.mxu0 0.0
        %1178 = vmatprep.subr.mxu0 0.0
        %1179 = vmatpush1.msra.mxu0 0.0
        %1180 = vmatprep.subr.mxu0 0.0
        %1181 = vmatpush1.msra.mxu0 0.0
        %1182 = vmatprep.subr.mxu0 0.0
        %1183 = vmatpush1.msra.mxu0 0.0
        %1184 = vmatprep.subr.mxu0 0.0
        %1185 = vmatpush1.msra.mxu0 0.0
        %1186 = vmatprep.subr.mxu0 0.0
        %1187 = vmatpush1.msra.mxu0 0.0
        %1188 = vmatprep.mubr.f32.mxu0 0.0
        %1189 = vmatmul.mubr.f32.gmra.mrb[0].mxu0 %v1107
        %v1190 = vpop.f32.mrb[0].mxu0
        %v1191 = vadd.f32 %v1088, %v1190
        %v1192 = vpop.f32.mrb[0].mxu0
        %v1193 = vadd.f32 %v1088, %v1192
        %1194 = vmatprep.mubr.f32.mxu0 0.0
        %1195 = vmatmul.mubr.f32.gmra.mrb[0].mxu0 %v1110
        %v1196 = vpop.f32.mrb[0].mxu0
        %v1197 = vadd.f32 %v1093, %v1196
        %v1198 = vpop.f32.mrb[0].mxu0
        %v1199 = vadd.f32 %v1093, %v1198
        %1200 = vmatprep.mubr.f32.mxu0 0.0
        %1201 = vmatmul.mubr.f32.gmra.mrb[0].mxu0 %v1113
        %v1202 = vpop.f32.mrb[0].mxu0
        %v1203 = vadd.f32 %v1098, %v1202
        %v1204 = vpop.f32.mrb[0].mxu0
        %v1205 = vadd.f32 %v1098, %v1204
        %1206 = vmatprep.mubr.f32.mxu0 0.0
        %1207 = vmatmul.mubr.f32.gmra.mrb[0].mxu0 %v1116
        %v1208 = vpop.f32.mrb[0].mxu0
        %v1209 = vadd.f32 %v1103, %v1208
        %v1210 = vpop.f32.mrb[0].mxu0
        %v1211 = vadd.f32 %v1103, %v1210
        %1212 = vdwg.mxu0
        %v1213 = vld [vmem:[%s6] sm:$0xff]
        %v1214 = vld [vmem:[%s6 + $0x8] sm:$0xff]
        %v1215 = vld [vmem:[%s6 + $0x10] sm:$0xff]
        %v1216 = vld [vmem:[%s6 + $0x18] sm:$0xff]
        %1218 = vset.pattern.permute.xlu0 0
        %1219 = vperm.xlu0 %1218, %v1213
        %v1220 = vpop.permute.xlu0 %1219
        %1223 = vset.pattern.permute.xlu0 0
        %1224 = vperm.xlu0 %1223, %v1214
        %v1225 = vpop.permute.xlu0 %1224
        %1228 = vset.pattern.permute.xlu0 0
        %1229 = vperm.xlu0 %1228, %v1215
        %v1230 = vpop.permute.xlu0 %1229
        %1233 = vset.pattern.permute.xlu0 0
        %1234 = vperm.xlu0 %1233, %v1216
        %v1235 = vpop.permute.xlu0 %1234
        %v1237 = vmul.f32 %v1191, %v1220
        %v1238 = vmul.f32 %v1193, %v1220
        %v1239 = vmul.f32 %v1197, %v1225
        %v1240 = vmul.f32 %v1199, %v1225
        %v1241 = vmul.f32 %v1203, %v1230
        %v1242 = vmul.f32 %v1205, %v1230
        %v1243 = vmul.f32 %v1209, %v1235
        %v1244 = vmul.f32 %v1211, %v1235
        %v1245 = vld [vmem:[%s7] sm:$0xff]
        %v1246 = vld [vmem:[%s7 + $0x8] sm:$0xff]
        %v1247 = vld [vmem:[%s7 + $0x10] sm:$0xff]
        %v1248 = vld [vmem:[%s7 + $0x18] sm:$0xff]
        %1250 = vset.pattern.permute.xlu0 0
        %1251 = vperm.xlu0 %1250, %v1245
        %v1252 = vpop.permute.xlu0 %1251
        %1255 = vset.pattern.permute.xlu0 0
        %1256 = vperm.xlu0 %1255, %v1246
        %v1257 = vpop.permute.xlu0 %1256
        %1260 = vset.pattern.permute.xlu0 0
        %1261 = vperm.xlu0 %1260, %v1247
        %v1262 = vpop.permute.xlu0 %1261
        %1265 = vset.pattern.permute.xlu0 0
        %1266 = vperm.xlu0 %1265, %v1248
        %v1267 = vpop.permute.xlu0 %1266
        %v1269 = vadd.f32 %v1237, %v1252
        %v1270 = vadd.f32 %v1238, %v1252
        %v1271 = vadd.f32 %v1239, %v1257
        %v1272 = vadd.f32 %v1240, %v1257
        %v1273 = vadd.f32 %v1241, %v1262
        %v1274 = vadd.f32 %v1242, %v1262
        %v1275 = vadd.f32 %v1243, %v1267
        %v1276 = vadd.f32 %v1244, %v1267
        %v1277 = vmul.f32 %v1269, 0.5
        %v1278 = vmul.f32 %v1270, 0.5
        %v1279 = vmul.f32 %v1271, 0.5
        %v1280 = vmul.f32 %v1272, 0.5
        %v1281 = vmul.f32 %v1273, 0.5
        %v1282 = vmul.f32 %v1274, 0.5
        %v1283 = vmul.f32 %v1275, 0.5
        %v1284 = vmul.f32 %v1276, 0.5
        %v1285 = vmul.f32 %v1269, 0.70710677
        %v1286 = vmul.f32 %v1270, 0.70710677
        %v1287 = vmul.f32 %v1271, 0.70710677
        %v1288 = vmul.f32 %v1272, 0.70710677
        %v1289 = vmul.f32 %v1273, 0.70710677
        %v1290 = vmul.f32 %v1274, 0.70710677
        %v1291 = vmul.f32 %v1275, 0.70710677
        %v1292 = vmul.f32 %v1276, 0.70710677
        %vm1293 = vcmp.lt.f32.partialorder %v1285, 0.0
        %vm1294 = vcmp.lt.f32.partialorder %v1286, 0.0
        %vm1295 = vcmp.lt.f32.partialorder %v1287, 0.0
        %vm1296 = vcmp.lt.f32.partialorder %v1288, 0.0
        %vm1297 = vcmp.lt.f32.partialorder %v1289, 0.0
        %vm1298 = vcmp.lt.f32.partialorder %v1290, 0.0
        %vm1299 = vcmp.lt.f32.partialorder %v1291, 0.0
        %vm1300 = vcmp.lt.f32.partialorder %v1292, 0.0
        %v1301 = vsel %vm1293, -1.0, 1.0
        %v1302 = vsel %vm1294, -1.0, 1.0
        %v1303 = vsel %vm1295, -1.0, 1.0
        %v1304 = vsel %vm1296, -1.0, 1.0
        %v1305 = vsel %vm1297, -1.0, 1.0
        %v1306 = vsel %vm1298, -1.0, 1.0
        %v1307 = vsel %vm1299, -1.0, 1.0
        %v1308 = vsel %vm1300, -1.0, 1.0
        %v1309 = vand.u32 2147483647, %v1285
        %v1310 = vand.u32 2147483647, %v1286
        %v1311 = vand.u32 2147483647, %v1287
        %v1312 = vand.u32 2147483647, %v1288
        %v1313 = vand.u32 2147483647, %v1289
        %v1314 = vand.u32 2147483647, %v1290
        %v1315 = vand.u32 2147483647, %v1291
        %v1316 = vand.u32 2147483647, %v1292
        %v1317 = vmul.f32 %v1309, 0.3275911
        %v1318 = vmul.f32 %v1310, 0.3275911
        %v1319 = vmul.f32 %v1311, 0.3275911
        %v1320 = vmul.f32 %v1312, 0.3275911
        %v1321 = vmul.f32 %v1313, 0.3275911
        %v1322 = vmul.f32 %v1314, 0.3275911
        %v1323 = vmul.f32 %v1315, 0.3275911
        %v1324 = vmul.f32 %v1316, 0.3275911
        %v1325 = vadd.f32 %v1317, 1.0
        %v1326 = vadd.f32 %v1318, 1.0
        %v1327 = vadd.f32 %v1319, 1.0
        %v1328 = vadd.f32 %v1320, 1.0
        %v1329 = vadd.f32 %v1321, 1.0
        %v1330 = vadd.f32 %v1322, 1.0
        %v1331 = vadd.f32 %v1323, 1.0
        %v1332 = vadd.f32 %v1324, 1.0
        %v1333 = vrcp.pop %v1325
        %v1334 = vmul.f32 1.0, %v1333
        %v1335 = vrcp.pop %v1326
        %v1336 = vmul.f32 1.0, %v1335
        %v1337 = vrcp.pop %v1327
        %v1338 = vmul.f32 1.0, %v1337
        %v1339 = vrcp.pop %v1328
        %v1340 = vmul.f32 1.0, %v1339
        %v1341 = vrcp.pop %v1329
        %v1342 = vmul.f32 1.0, %v1341
        %v1343 = vrcp.pop %v1330
        %v1344 = vmul.f32 1.0, %v1343
        %v1345 = vrcp.pop %v1331
        %v1346 = vmul.f32 1.0, %v1345
        %v1347 = vrcp.pop %v1332
        %v1348 = vmul.f32 1.0, %v1347
        %v1349 = vmul.f32 %v1334, 1.0614054
        %v1350 = vmul.f32 %v1336, 1.0614054
        %v1351 = vmul.f32 %v1338, 1.0614054
        %v1352 = vmul.f32 %v1340, 1.0614054
        %v1353 = vmul.f32 %v1342, 1.0614054
        %v1354 = vmul.f32 %v1344, 1.0614054
        %v1355 = vmul.f32 %v1346, 1.0614054
        %v1356 = vmul.f32 %v1348, 1.0614054
        %v1357 = vadd.f32 %v1349, -1.4531521
        %v1358 = vadd.f32 %v1350, -1.4531521
        %v1359 = vadd.f32 %v1351, -1.4531521
        %v1360 = vadd.f32 %v1352, -1.4531521
        %v1361 = vadd.f32 %v1353, -1.4531521
        %v1362 = vadd.f32 %v1354, -1.4531521
        %v1363 = vadd.f32 %v1355, -1.4531521
        %v1364 = vadd.f32 %v1356, -1.4531521
        %v1365 = vmul.f32 %v1334, %v1357
        %v1366 = vmul.f32 %v1336, %v1358
        %v1367 = vmul.f32 %v1338, %v1359
        %v1368 = vmul.f32 %v1340, %v1360
        %v1369 = vmul.f32 %v1342, %v1361
        %v1370 = vmul.f32 %v1344, %v1362
        %v1371 = vmul.f32 %v1346, %v1363
        %v1372 = vmul.f32 %v1348, %v1364
        %v1373 = vadd.f32 %v1365, 1.4214138
        %v1374 = vadd.f32 %v1366, 1.4214138
        %v1375 = vadd.f32 %v1367, 1.4214138
        %v1376 = vadd.f32 %v1368, 1.4214138
        %v1377 = vadd.f32 %v1369, 1.4214138
        %v1378 = vadd.f32 %v1370, 1.4214138
        %v1379 = vadd.f32 %v1371, 1.4214138
        %v1380 = vadd.f32 %v1372, 1.4214138
        %v1381 = vmul.f32 %v1334, %v1373
        %v1382 = vmul.f32 %v1336, %v1374
        %v1383 = vmul.f32 %v1338, %v1375
        %v1384 = vmul.f32 %v1340, %v1376
        %v1385 = vmul.f32 %v1342, %v1377
        %v1386 = vmul.f32 %v1344, %v1378
        %v1387 = vmul.f32 %v1346, %v1379
        %v1388 = vmul.f32 %v1348, %v1380
        %v1389 = vadd.f32 %v1381, -0.28449672
        %v1390 = vadd.f32 %v1382, -0.28449672
        %v1391 = vadd.f32 %v1383, -0.28449672
        %v1392 = vadd.f32 %v1384, -0.28449672
        %v1393 = vadd.f32 %v1385, -0.28449672
        %v1394 = vadd.f32 %v1386, -0.28449672
        %v1395 = vadd.f32 %v1387, -0.28449672
        %v1396 = vadd.f32 %v1388, -0.28449672
        %v1397 = vmul.f32 %v1334, %v1389
        %v1398 = vmul.f32 %v1336, %v1390
        %v1399 = vmul.f32 %v1338, %v1391
        %v1400 = vmul.f32 %v1340, %v1392
        %v1401 = vmul.f32 %v1342, %v1393
        %v1402 = vmul.f32 %v1344, %v1394
        %v1403 = vmul.f32 %v1346, %v1395
        %v1404 = vmul.f32 %v1348, %v1396
        %v1405 = vadd.f32 %v1397, 0.2548296
        %v1406 = vadd.f32 %v1398, 0.2548296
        %v1407 = vadd.f32 %v1399, 0.2548296
        %v1408 = vadd.f32 %v1400, 0.2548296
        %v1409 = vadd.f32 %v1401, 0.2548296
        %v1410 = vadd.f32 %v1402, 0.2548296
        %v1411 = vadd.f32 %v1403, 0.2548296
        %v1412 = vadd.f32 %v1404, 0.2548296
        %v1413 = vmul.f32 %v1334, %v1405
        %v1414 = vmul.f32 %v1336, %v1406
        %v1415 = vmul.f32 %v1338, %v1407
        %v1416 = vmul.f32 %v1340, %v1408
        %v1417 = vmul.f32 %v1342, %v1409
        %v1418 = vmul.f32 %v1344, %v1410
        %v1419 = vmul.f32 %v1346, %v1411
        %v1420 = vmul.f32 %v1348, %v1412
        %v1421 = vsub.f32 0.0, %v1309
        %v1422 = vsub.f32 0.0, %v1310
        %v1423 = vsub.f32 0.0, %v1311
        %v1424 = vsub.f32 0.0, %v1312
        %v1425 = vsub.f32 0.0, %v1313
        %v1426 = vsub.f32 0.0, %v1314
        %v1427 = vsub.f32 0.0, %v1315
        %v1428 = vsub.f32 0.0, %v1316
        %v1429 = vmul.f32 %v1421, %v1309
        %v1430 = vmul.f32 %v1422, %v1310
        %v1431 = vmul.f32 %v1423, %v1311
        %v1432 = vmul.f32 %v1424, %v1312
        %v1433 = vmul.f32 %v1425, %v1313
        %v1434 = vmul.f32 %v1426, %v1314
        %v1435 = vmul.f32 %v1427, %v1315
        %v1436 = vmul.f32 %v1428, %v1316
        %v1437 = vmul.f32 %v1429, 1.442695
        %v1438 = vpow.pop %v1437
        %v1439 = vmul.f32 %v1430, 1.442695
        %v1440 = vpow.pop %v1439
        %v1441 = vmul.f32 %v1431, 1.442695
        %v1442 = vpow.pop %v1441
        %v1443 = vmul.f32 %v1432, 1.442695
        %v1444 = vpow.pop %v1443
        %v1445 = vmul.f32 %v1433, 1.442695
        %v1446 = vpow.pop %v1445
        %v1447 = vmul.f32 %v1434, 1.442695
        %v1448 = vpow.pop %v1447
        %v1449 = vmul.f32 %v1435, 1.442695
        %v1450 = vpow.pop %v1449
        %v1451 = vmul.f32 %v1436, 1.442695
        %v1452 = vpow.pop %v1451
        %v1453 = vmul.f32 %v1413, %v1438
        %v1454 = vmul.f32 %v1414, %v1440
        %v1455 = vmul.f32 %v1415, %v1442
        %v1456 = vmul.f32 %v1416, %v1444
        %v1457 = vmul.f32 %v1417, %v1446
        %v1458 = vmul.f32 %v1418, %v1448
        %v1459 = vmul.f32 %v1419, %v1450
        %v1460 = vmul.f32 %v1420, %v1452
        %v1461 = vsub.f32 1.0, %v1453
        %v1462 = vsub.f32 1.0, %v1454
        %v1463 = vsub.f32 1.0, %v1455
        %v1464 = vsub.f32 1.0, %v1456
        %v1465 = vsub.f32 1.0, %v1457
        %v1466 = vsub.f32 1.0, %v1458
        %v1467 = vsub.f32 1.0, %v1459
        %v1468 = vsub.f32 1.0, %v1460
        %v1469 = vmul.f32 %v1301, %v1461
        %v1470 = vmul.f32 %v1302, %v1462
        %v1471 = vmul.f32 %v1303, %v1463
        %v1472 = vmul.f32 %v1304, %v1464
        %v1473 = vmul.f32 %v1305, %v1465
        %v1474 = vmul.f32 %v1306, %v1466
        %v1475 = vmul.f32 %v1307, %v1467
        %v1476 = vmul.f32 %v1308, %v1468
        %v1477 = vadd.f32 %v1469, 1.0
        %v1478 = vadd.f32 %v1470, 1.0
        %v1479 = vadd.f32 %v1471, 1.0
        %v1480 = vadd.f32 %v1472, 1.0
        %v1481 = vadd.f32 %v1473, 1.0
        %v1482 = vadd.f32 %v1474, 1.0
        %v1483 = vadd.f32 %v1475, 1.0
        %v1484 = vadd.f32 %v1476, 1.0
        %v1485 = vmul.f32 %v1277, %v1477
        %v1486 = vmul.f32 %v1278, %v1478
        %v1487 = vmul.f32 %v1279, %v1479
        %v1488 = vmul.f32 %v1280, %v1480
        %v1489 = vmul.f32 %v1281, %v1481
        %v1490 = vmul.f32 %v1282, %v1482
        %v1491 = vmul.f32 %v1283, %v1483
        %v1492 = vmul.f32 %v1284, %v1484
        %v1493 = vld [vmem:[%s8] sm:$0xff]
        %v1494 = vld [vmem:[%s8 + $0x8] sm:$0xff]
        %v1495 = vld [vmem:[%s8 + $0x10] sm:$0xff]
        %v1496 = vld [vmem:[%s8 + $0x18] sm:$0xff]
        %v1497 = vld [vmem:[%s9] sm:$0xff]
        %v1498 = vld [vmem:[%s9 + $0x8] sm:$0xff]
        %v1499 = vld [vmem:[%s9 + $0x10] sm:$0xff]
        %v1500 = vld [vmem:[%s9 + $0x18] sm:$0xff]
        %1502 = vset.pattern.permute.xlu0 0
        %1503 = vperm.xlu0 %1502, %v1497
        %v1504 = vpop.permute.xlu0 %1503
        %1507 = vset.pattern.permute.xlu0 0
        %1508 = vperm.xlu0 %1507, %v1498
        %v1509 = vpop.permute.xlu0 %1508
        %1512 = vset.pattern.permute.xlu0 0
        %1513 = vperm.xlu0 %1512, %v1499
        %v1514 = vpop.permute.xlu0 %1513
        %1517 = vset.pattern.permute.xlu0 0
        %1518 = vperm.xlu0 %1517, %v1500
        %v1519 = vpop.permute.xlu0 %1518
        %vm1521 = vcmask 261120
        %v1523 = vsel %vm1521, %v1493, 0
        %v1526 = vsel %vm1521, %v1494, 0
        %v1529 = vsel %vm1521, %v1495, 0
        %v1532 = vsel %vm1521, %v1496, 0
        %1534 = vmatprep.subr.mxu0 %v1486
        %1535 = vmatpush1.msra.mxu0 %v1485
        %1536 = vmatprep.subr.mxu0 %v1488
        %1537 = vmatpush1.msra.mxu0 %v1487
        %1538 = vmatprep.subr.mxu0 %v1490
        %1539 = vmatpush1.msra.mxu0 %v1489
        %1540 = vmatprep.subr.mxu0 %v1492
        %1541 = vmatpush1.msra.mxu0 %v1491
        %1542 = vmatprep.subr.mxu0 0.0
        %1543 = vmatpush1.msra.mxu0 0.0
        %1544 = vmatprep.subr.mxu0 0.0
        %1545 = vmatpush1.msra.mxu0 0.0
        %1546 = vmatprep.subr.mxu0 0.0
        %1547 = vmatpush1.msra.mxu0 0.0
        %1548 = vmatprep.subr.mxu0 0.0
        %1549 = vmatpush1.msra.mxu0 0.0
        %1550 = vmatprep.subr.mxu0 0.0
        %1551 = vmatpush1.msra.mxu0 0.0
        %1552 = vmatprep.subr.mxu0 0.0
        %1553 = vmatpush1.msra.mxu0 0.0
        %1554 = vmatprep.subr.mxu0 0.0
        %1555 = vmatpush1.msra.mxu0 0.0
        %1556 = vmatprep.subr.mxu0 0.0
        %1557 = vmatpush1.msra.mxu0 0.0
        %1558 = vmatprep.subr.mxu0 0.0
        %1559 = vmatpush1.msra.mxu0 0.0
        %1560 = vmatprep.subr.mxu0 0.0
        %1561 = vmatpush1.msra.mxu0 0.0
        %1562 = vmatprep.subr.mxu0 0.0
        %1563 = vmatpush1.msra.mxu0 0.0
        %1564 = vmatprep.subr.mxu0 0.0
        %1565 = vmatpush1.msra.mxu0 0.0
        %1566 = vmatprep.subr.mxu0 0.0
        %1567 = vmatpush1.msra.mxu0 0.0
        %1568 = vmatprep.subr.mxu0 0.0
        %1569 = vmatpush1.msra.mxu0 0.0
        %1570 = vmatprep.subr.mxu0 0.0
        %1571 = vmatpush1.msra.mxu0 0.0
        %1572 = vmatprep.subr.mxu0 0.0
        %1573 = vmatpush1.msra.mxu0 0.0
        %1574 = vmatprep.subr.mxu0 0.0
        %1575 = vmatpush1.msra.mxu0 0.0
        %1576 = vmatprep.subr.mxu0 0.0
        %1577 = vmatpush1.msra.mxu0 0.0
        %1578 = vmatprep.subr.mxu0 0.0
        %1579 = vmatpush1.msra.mxu0 0.0
        %1580 = vmatprep.subr.mxu0 0.0
        %1581 = vmatpush1.msra.mxu0 0.0
        %1582 = vmatprep.subr.mxu0 0.0
        %1583 = vmatpush1.msra.mxu0 0.0
        %1584 = vmatprep.subr.mxu0 0.0
        %1585 = vmatpush1.msra.mxu0 0.0
        %1586 = vmatprep.subr.mxu0 0.0
        %1587 = vmatpush1.msra.mxu0 0.0
        %1588 = vmatprep.subr.mxu0 0.0
        %1589 = vmatpush1.msra.mxu0 0.0
        %1590 = vmatprep.subr.mxu0 0.0
        %1591 = vmatpush1.msra.mxu0 0.0
        %1592 = vmatprep.subr.mxu0 0.0
        %1593 = vmatpush1.msra.mxu0 0.0
        %1594 = vmatprep.subr.mxu0 0.0
        %1595 = vmatpush1.msra.mxu0 0.0
        %1596 = vmatprep.subr.mxu0 0.0
        %1597 = vmatpush1.msra.mxu0 0.0
        %1598 = vmatprep.mubr.f32.mxu0 0.0
        %1599 = vmatmul.mubr.f32.gmra.mrb[0].mxu0 %v1523
        %v1600 = vpop.f32.mrb[0].mxu0
        %v1601 = vadd.f32 %v1504, %v1600
        %v1602 = vpop.f32.mrb[0].mxu0
        %v1603 = vadd.f32 %v1504, %v1602
        %1604 = vmatprep.mubr.f32.mxu0 0.0
        %1605 = vmatmul.mubr.f32.gmra.mrb[0].mxu0 %v1526
        %v1606 = vpop.f32.mrb[0].mxu0
        %v1607 = vadd.f32 %v1509, %v1606
        %v1608 = vpop.f32.mrb[0].mxu0
        %v1609 = vadd.f32 %v1509, %v1608
        %1610 = vmatprep.mubr.f32.mxu0 0.0
        %1611 = vmatmul.mubr.f32.gmra.mrb[0].mxu0 %v1529
        %v1612 = vpop.f32.mrb[0].mxu0
        %v1613 = vadd.f32 %v1514, %v1612
        %v1614 = vpop.f32.mrb[0].mxu0
        %v1615 = vadd.f32 %v1514, %v1614
        %1616 = vmatprep.mubr.f32.mxu0 0.0
        %1617 = vmatmul.mubr.f32.gmra.mrb[0].mxu0 %v1532
        %v1618 = vpop.f32.mrb[0].mxu0
        %v1619 = vadd.f32 %v1519, %v1618
        %v1620 = vpop.f32.mrb[0].mxu0
        %v1621 = vadd.f32 %v1519, %v1620
        %1622 = vdwg.mxu0
        %v1623 = vld [vmem:[%s10] sm:$0xff]
        %v1624 = vld [vmem:[%s10 + $0x8] sm:$0xff]
        %v1625 = vld [vmem:[%s10 + $0x10] sm:$0xff]
        %v1626 = vld [vmem:[%s10 + $0x18] sm:$0xff]
        %1628 = vset.pattern.permute.xlu0 0
        %1629 = vperm.xlu0 %1628, %v1623
        %v1630 = vpop.permute.xlu0 %1629
        %1633 = vset.pattern.permute.xlu0 0
        %1634 = vperm.xlu0 %1633, %v1624
        %v1635 = vpop.permute.xlu0 %1634
        %1638 = vset.pattern.permute.xlu0 0
        %1639 = vperm.xlu0 %1638, %v1625
        %v1640 = vpop.permute.xlu0 %1639
        %1643 = vset.pattern.permute.xlu0 0
        %1644 = vperm.xlu0 %1643, %v1626
        %v1645 = vpop.permute.xlu0 %1644
        %v1647 = vmul.f32 %v1601, %v1630
        %v1648 = vmul.f32 %v1603, %v1630
        %v1649 = vmul.f32 %v1607, %v1635
        %v1650 = vmul.f32 %v1609, %v1635
        %v1651 = vmul.f32 %v1613, %v1640
        %v1652 = vmul.f32 %v1615, %v1640
        %v1653 = vmul.f32 %v1619, %v1645
        %v1654 = vmul.f32 %v1621, %v1645
        %v1655 = vld [vmem:[%s11] sm:$0xff]
        %v1656 = vld [vmem:[%s11 + $0x8] sm:$0xff]
        %v1657 = vld [vmem:[%s11 + $0x10] sm:$0xff]
        %v1658 = vld [vmem:[%s11 + $0x18] sm:$0xff]
        %1660 = vset.pattern.permute.xlu0 0
        %1661 = vperm.xlu0 %1660, %v1655
        %v1662 = vpop.permute.xlu0 %1661
        %1665 = vset.pattern.permute.xlu0 0
        %1666 = vperm.xlu0 %1665, %v1656
        %v1667 = vpop.permute.xlu0 %1666
        %1670 = vset.pattern.permute.xlu0 0
        %1671 = vperm.xlu0 %1670, %v1657
        %v1672 = vpop.permute.xlu0 %1671
        %1675 = vset.pattern.permute.xlu0 0
        %1676 = vperm.xlu0 %1675, %v1658
        %v1677 = vpop.permute.xlu0 %1676
        %v1679 = vadd.f32 %v1647, %v1662
        %v1680 = vadd.f32 %v1648, %v1662
        %v1681 = vadd.f32 %v1649, %v1667
        %v1682 = vadd.f32 %v1650, %v1667
        %v1683 = vadd.f32 %v1651, %v1672
        %v1684 = vadd.f32 %v1652, %v1672
        %v1685 = vadd.f32 %v1653, %v1677
        %v1686 = vadd.f32 %v1654, %v1677
        %v1687 = vmul.f32 %v1679, 0.5
        %v1688 = vmul.f32 %v1680, 0.5
        %v1689 = vmul.f32 %v1681, 0.5
        %v1690 = vmul.f32 %v1682, 0.5
        %v1691 = vmul.f32 %v1683, 0.5
        %v1692 = vmul.f32 %v1684, 0.5
        %v1693 = vmul.f32 %v1685, 0.5
        %v1694 = vmul.f32 %v1686, 0.5
        %v1695 = vmul.f32 %v1679, 0.70710677
        %v1696 = vmul.f32 %v1680, 0.70710677
        %v1697 = vmul.f32 %v1681, 0.70710677
        %v1698 = vmul.f32 %v1682, 0.70710677
        %v1699 = vmul.f32 %v1683, 0.70710677
        %v1700 = vmul.f32 %v1684, 0.70710677
        %v1701 = vmul.f32 %v1685, 0.70710677
        %v1702 = vmul.f32 %v1686, 0.70710677
        %vm1703 = vcmp.lt.f32.partialorder %v1695, 0.0
        %vm1704 = vcmp.lt.f32.partialorder %v1696, 0.0
        %vm1705 = vcmp.lt.f32.partialorder %v1697, 0.0
        %vm1706 = vcmp.lt.f32.partialorder %v1698, 0.0
        %vm1707 = vcmp.lt.f32.partialorder %v1699, 0.0
        %vm1708 = vcmp.lt.f32.partialorder %v1700, 0.0
        %vm1709 = vcmp.lt.f32.partialorder %v1701, 0.0
        %vm1710 = vcmp.lt.f32.partialorder %v1702, 0.0
        %v1711 = vsel %vm1703, -1.0, 1.0
        %v1712 = vsel %vm1704, -1.0, 1.0
        %v1713 = vsel %vm1705, -1.0, 1.0
        %v1714 = vsel %vm1706, -1.0, 1.0
        %v1715 = vsel %vm1707, -1.0, 1.0
        %v1716 = vsel %vm1708, -1.0, 1.0
        %v1717 = vsel %vm1709, -1.0, 1.0
        %v1718 = vsel %vm1710, -1.0, 1.0
        %v1719 = vand.u32 2147483647, %v1695
        %v1720 = vand.u32 2147483647, %v1696
        %v1721 = vand.u32 2147483647, %v1697
        %v1722 = vand.u32 2147483647, %v1698
        %v1723 = vand.u32 2147483647, %v1699
        %v1724 = vand.u32 2147483647, %v1700
        %v1725 = vand.u32 2147483647, %v1701
        %v1726 = vand.u32 2147483647, %v1702
        %v1727 = vmul.f32 %v1719, 0.3275911
        %v1728 = vmul.f32 %v1720, 0.3275911
        %v1729 = vmul.f32 %v1721, 0.3275911
        %v1730 = vmul.f32 %v1722, 0.3275911
        %v1731 = vmul.f32 %v1723, 0.3275911
        %v1732 = vmul.f32 %v1724, 0.3275911
        %v1733 = vmul.f32 %v1725, 0.3275911
        %v1734 = vmul.f32 %v1726, 0.3275911
        %v1735 = vadd.f32 %v1727, 1.0
        %v1736 = vadd.f32 %v1728, 1.0
        %v1737 = vadd.f32 %v1729, 1.0
        %v1738 = vadd.f32 %v1730, 1.0
        %v1739 = vadd.f32 %v1731, 1.0
        %v1740 = vadd.f32 %v1732, 1.0
        %v1741 = vadd.f32 %v1733, 1.0
        %v1742 = vadd.f32 %v1734, 1.0
        %v1743 = vrcp.pop %v1735
        %v1744 = vmul.f32 1.0, %v1743
        %v1745 = vrcp.pop %v1736
        %v1746 = vmul.f32 1.0, %v1745
        %v1747 = vrcp.pop %v1737
        %v1748 = vmul.f32 1.0, %v1747
        %v1749 = vrcp.pop %v1738
        %v1750 = vmul.f32 1.0, %v1749
        %v1751 = vrcp.pop %v1739
        %v1752 = vmul.f32 1.0, %v1751
        %v1753 = vrcp.pop %v1740
        %v1754 = vmul.f32 1.0, %v1753
        %v1755 = vrcp.pop %v1741
        %v1756 = vmul.f32 1.0, %v1755
        %v1757 = vrcp.pop %v1742
        %v1758 = vmul.f32 1.0, %v1757
        %v1759 = vmul.f32 %v1744, 1.0614054
        %v1760 = vmul.f32 %v1746, 1.0614054
        %v1761 = vmul.f32 %v1748, 1.0614054
        %v1762 = vmul.f32 %v1750, 1.0614054
        %v1763 = vmul.f32 %v1752, 1.0614054
        %v1764 = vmul.f32 %v1754, 1.0614054
        %v1765 = vmul.f32 %v1756, 1.0614054
        %v1766 = vmul.f32 %v1758, 1.0614054
        %v1767 = vadd.f32 %v1759, -1.4531521
        %v1768 = vadd.f32 %v1760, -1.4531521
        %v1769 = vadd.f32 %v1761, -1.4531521
        %v1770 = vadd.f32 %v1762, -1.4531521
        %v1771 = vadd.f32 %v1763, -1.4531521
        %v1772 = vadd.f32 %v1764, -1.4531521
        %v1773 = vadd.f32 %v1765, -1.4531521
        %v1774 = vadd.f32 %v1766, -1.4531521
        %v1775 = vmul.f32 %v1744, %v1767
        %v1776 = vmul.f32 %v1746, %v1768
        %v1777 = vmul.f32 %v1748, %v1769
        %v1778 = vmul.f32 %v1750, %v1770
        %v1779 = vmul.f32 %v1752, %v1771
        %v1780 = vmul.f32 %v1754, %v1772
        %v1781 = vmul.f32 %v1756, %v1773
        %v1782 = vmul.f32 %v1758, %v1774
        %v1783 = vadd.f32 %v1775, 1.4214138
        %v1784 = vadd.f32 %v1776, 1.4214138
        %v1785 = vadd.f32 %v1777, 1.4214138
        %v1786 = vadd.f32 %v1778, 1.4214138
        %v1787 = vadd.f32 %v1779, 1.4214138
        %v1788 = vadd.f32 %v1780, 1.4214138
        %v1789 = vadd.f32 %v1781, 1.4214138
        %v1790 = vadd.f32 %v1782, 1.4214138
        %v1791 = vmul.f32 %v1744, %v1783
        %v1792 = vmul.f32 %v1746, %v1784
        %v1793 = vmul.f32 %v1748, %v1785
        %v1794 = vmul.f32 %v1750, %v1786
        %v1795 = vmul.f32 %v1752, %v1787
        %v1796 = vmul.f32 %v1754, %v1788
        %v1797 = vmul.f32 %v1756, %v1789
        %v1798 = vmul.f32 %v1758, %v1790
        %v1799 = vadd.f32 %v1791, -0.28449672
        %v1800 = vadd.f32 %v1792, -0.28449672
        %v1801 = vadd.f32 %v1793, -0.28449672
        %v1802 = vadd.f32 %v1794, -0.28449672
        %v1803 = vadd.f32 %v1795, -0.28449672
        %v1804 = vadd.f32 %v1796, -0.28449672
        %v1805 = vadd.f32 %v1797, -0.28449672
        %v1806 = vadd.f32 %v1798, -0.28449672
        %v1807 = vmul.f32 %v1744, %v1799
        %v1808 = vmul.f32 %v1746, %v1800
        %v1809 = vmul.f32 %v1748, %v1801
        %v1810 = vmul.f32 %v1750, %v1802
        %v1811 = vmul.f32 %v1752, %v1803
        %v1812 = vmul.f32 %v1754, %v1804
        %v1813 = vmul.f32 %v1756, %v1805
        %v1814 = vmul.f32 %v1758, %v1806
        %v1815 = vadd.f32 %v1807, 0.2548296
        %v1816 = vadd.f32 %v1808, 0.2548296
        %v1817 = vadd.f32 %v1809, 0.2548296
        %v1818 = vadd.f32 %v1810, 0.2548296
        %v1819 = vadd.f32 %v1811, 0.2548296
        %v1820 = vadd.f32 %v1812, 0.2548296
        %v1821 = vadd.f32 %v1813, 0.2548296
        %v1822 = vadd.f32 %v1814, 0.2548296
        %v1823 = vmul.f32 %v1744, %v1815
        %v1824 = vmul.f32 %v1746, %v1816
        %v1825 = vmul.f32 %v1748, %v1817
        %v1826 = vmul.f32 %v1750, %v1818
        %v1827 = vmul.f32 %v1752, %v1819
        %v1828 = vmul.f32 %v1754, %v1820
        %v1829 = vmul.f32 %v1756, %v1821
        %v1830 = vmul.f32 %v1758, %v1822
        %v1831 = vsub.f32 0.0, %v1719
        %v1832 = vsub.f32 0.0, %v1720
        %v1833 = vsub.f32 0.0, %v1721
        %v1834 = vsub.f32 0.0, %v1722
        %v1835 = vsub.f32 0.0, %v1723
        %v1836 = vsub.f32 0.0, %v1724
        %v1837 = vsub.f32 0.0, %v1725
        %v1838 = vsub.f32 0.0, %v1726
        %v1839 = vmul.f32 %v1831, %v1719
        %v1840 = vmul.f32 %v1832, %v1720
        %v1841 = vmul.f32 %v1833, %v1721
        %v1842 = vmul.f32 %v1834, %v1722
        %v1843 = vmul.f32 %v1835, %v1723
        %v1844 = vmul.f32 %v1836, %v1724
        %v1845 = vmul.f32 %v1837, %v1725
        %v1846 = vmul.f32 %v1838, %v1726
        %v1847 = vmul.f32 %v1839, 1.442695
        %v1848 = vpow.pop %v1847
        %v1849 = vmul.f32 %v1840, 1.442695
        %v1850 = vpow.pop %v1849
        %v1851 = vmul.f32 %v1841, 1.442695
        %v1852 = vpow.pop %v1851
        %v1853 = vmul.f32 %v1842, 1.442695
        %v1854 = vpow.pop %v1853
        %v1855 = vmul.f32 %v1843, 1.442695
        %v1856 = vpow.pop %v1855
        %v1857 = vmul.f32 %v1844, 1.442695
        %v1858 = vpow.pop %v1857
        %v1859 = vmul.f32 %v1845, 1.442695
        %v1860 = vpow.pop %v1859
        %v1861 = vmul.f32 %v1846, 1.442695
        %v1862 = vpow.pop %v1861
        %v1863 = vmul.f32 %v1823, %v1848
        %v1864 = vmul.f32 %v1824, %v1850
        %v1865 = vmul.f32 %v1825, %v1852
        %v1866 = vmul.f32 %v1826, %v1854
        %v1867 = vmul.f32 %v1827, %v1856
        %v1868 = vmul.f32 %v1828, %v1858
        %v1869 = vmul.f32 %v1829, %v1860
        %v1870 = vmul.f32 %v1830, %v1862
        %v1871 = vsub.f32 1.0, %v1863
        %v1872 = vsub.f32 1.0, %v1864
        %v1873 = vsub.f32 1.0, %v1865
        %v1874 = vsub.f32 1.0, %v1866
        %v1875 = vsub.f32 1.0, %v1867
        %v1876 = vsub.f32 1.0, %v1868
        %v1877 = vsub.f32 1.0, %v1869
        %v1878 = vsub.f32 1.0, %v1870
        %v1879 = vmul.f32 %v1711, %v1871
        %v1880 = vmul.f32 %v1712, %v1872
        %v1881 = vmul.f32 %v1713, %v1873
        %v1882 = vmul.f32 %v1714, %v1874
        %v1883 = vmul.f32 %v1715, %v1875
        %v1884 = vmul.f32 %v1716, %v1876
        %v1885 = vmul.f32 %v1717, %v1877
        %v1886 = vmul.f32 %v1718, %v1878
        %v1887 = vadd.f32 %v1879, 1.0
        %v1888 = vadd.f32 %v1880, 1.0
        %v1889 = vadd.f32 %v1881, 1.0
        %v1890 = vadd.f32 %v1882, 1.0
        %v1891 = vadd.f32 %v1883, 1.0
        %v1892 = vadd.f32 %v1884, 1.0
        %v1893 = vadd.f32 %v1885, 1.0
        %v1894 = vadd.f32 %v1886, 1.0
        %v1895 = vmul.f32 %v1687, %v1887
        %v1896 = vmul.f32 %v1688, %v1888
        %v1897 = vmul.f32 %v1689, %v1889
        %v1898 = vmul.f32 %v1690, %v1890
        %v1899 = vmul.f32 %v1691, %v1891
        %v1900 = vmul.f32 %v1692, %v1892
        %v1901 = vmul.f32 %v1693, %v1893
        %v1902 = vmul.f32 %v1694, %v1894
        %v1903 = vld [vmem:[%s12] sm:$0xff]
        %v1904 = vld [vmem:[%s13] sm:$0xff]
        %1906 = vset.pattern.permute.xlu0 0
        %1907 = vperm.xlu0 %1906, %v1904
        %v1908 = vpop.permute.xlu0 %1907
        %v1911 = vsel %vm1521, %v1903, 0
        %1913 = vmatprep.subr.mxu0 %v1896
        %1914 = vmatpush1.msra.mxu0 %v1895
        %1915 = vmatprep.subr.mxu0 %v1898
        %1916 = vmatpush1.msra.mxu0 %v1897
        %1917 = vmatprep.subr.mxu0 %v1900
        %1918 = vmatpush1.msra.mxu0 %v1899
        %1919 = vmatprep.subr.mxu0 %v1902
        %1920 = vmatpush1.msra.mxu0 %v1901
        %1921 = vmatprep.subr.mxu0 0.0
        %1922 = vmatpush1.msra.mxu0 0.0
        %1923 = vmatprep.subr.mxu0 0.0
        %1924 = vmatpush1.msra.mxu0 0.0
        %1925 = vmatprep.subr.mxu0 0.0
        %1926 = vmatpush1.msra.mxu0 0.0
        %1927 = vmatprep.subr.mxu0 0.0
        %1928 = vmatpush1.msra.mxu0 0.0
        %1929 = vmatprep.subr.mxu0 0.0
        %1930 = vmatpush1.msra.mxu0 0.0
        %1931 = vmatprep.subr.mxu0 0.0
        %1932 = vmatpush1.msra.mxu0 0.0
        %1933 = vmatprep.subr.mxu0 0.0
        %1934 = vmatpush1.msra.mxu0 0.0
        %1935 = vmatprep.subr.mxu0 0.0
        %1936 = vmatpush1.msra.mxu0 0.0
        %1937 = vmatprep.subr.mxu0 0.0
        %1938 = vmatpush1.msra.mxu0 0.0
        %1939 = vmatprep.subr.mxu0 0.0
        %1940 = vmatpush1.msra.mxu0 0.0
        %1941 = vmatprep.subr.mxu0 0.0
        %1942 = vmatpush1.msra.mxu0 0.0
        %1943 = vmatprep.subr.mxu0 0.0
        %1944 = vmatpush1.msra.mxu0 0.0
        %1945 = vmatprep.subr.mxu0 0.0
        %1946 = vmatpush1.msra.mxu0 0.0
        %1947 = vmatprep.subr.mxu0 0.0
        %1948 = vmatpush1.msra.mxu0 0.0
        %1949 = vmatprep.subr.mxu0 0.0
        %1950 = vmatpush1.msra.mxu0 0.0
        %1951 = vmatprep.subr.mxu0 0.0
        %1952 = vmatpush1.msra.mxu0 0.0
        %1953 = vmatprep.subr.mxu0 0.0
        %1954 = vmatpush1.msra.mxu0 0.0
        %1955 = vmatprep.subr.mxu0 0.0
        %1956 = vmatpush1.msra.mxu0 0.0
        %1957 = vmatprep.subr.mxu0 0.0
        %1958 = vmatpush1.msra.mxu0 0.0
        %1959 = vmatprep.subr.mxu0 0.0
        %1960 = vmatpush1.msra.mxu0 0.0
        %1961 = vmatprep.subr.mxu0 0.0
        %1962 = vmatpush1.msra.mxu0 0.0
        %1963 = vmatprep.subr.mxu0 0.0
        %1964 = vmatpush1.msra.mxu0 0.0
        %1965 = vmatprep.subr.mxu0 0.0
        %1966 = vmatpush1.msra.mxu0 0.0
        %1967 = vmatprep.subr.mxu0 0.0
        %1968 = vmatpush1.msra.mxu0 0.0
        %1969 = vmatprep.subr.mxu0 0.0
        %1970 = vmatpush1.msra.mxu0 0.0
        %1971 = vmatprep.subr.mxu0 0.0
        %1972 = vmatpush1.msra.mxu0 0.0
        %1973 = vmatprep.subr.mxu0 0.0
        %1974 = vmatpush1.msra.mxu0 0.0
        %1975 = vmatprep.subr.mxu0 0.0
        %1976 = vmatpush1.msra.mxu0 0.0
        %1977 = vmatprep.mubr.f32.mxu0 0.0
        %1978 = vmatmul.mubr.f32.gmra.mrb[0].mxu0 %v1911
        %v1979 = vpop.f32.mrb[0].mxu0
        %v1980 = vadd.f32 %v1908, %v1979
        %v1981 = vpop.f32.mrb[0].mxu0
        %v1982 = vadd.f32 %v1908, %v1981
        %1983 = vdwg.mxu0
        %vm1984 = vcmp.ne.s32.totalorder %v505, %v507
        %v1985 = vsel %vm1984, 1, 0
        %v1986 = vcvt.s32.f32 %v1985
        %v1988 = vlaneseq
        %v1989 = vshrl.u32 %v1988, 7
        %v1990 = vsub.s32 0, %v1989
        %v1991 = vrot.slane %v1986, %v1990
        %v1992 = vlaneseq
        %v1993 = vshrl.u32 %v1992, 7
        %v1994 = vsub.s32 1, %v1993
        %v1995 = vrot.slane %v1986, %v1994
        %v1998 = vmul.f32 %v1980, %v1991
        %v1999 = vmul.f32 %v1982, %v1995
        %2000 = vst [vmem:[%s458] sm:$0xff] %v1998
        %2001 = vst [vmem:[%s458 + $0x8] sm:$0xff] %v1999
        %s2002 = sand.u32 %s335, 1
        %s2003 = scalar_lea.sflag [#allocation3], %s2002
        %s2004 = sand.u32 %s335, 1
        %s2005 = smul.addr %s2004, 16
        %s2006 = scalar_lea.vmem [#allocation2], %s2005
        // Predicated region
        $region77: #{tpu_custom_call.1} parent=75 // pred_check
          %p2007 = pneg %p345
        $region78: #{tpu_custom_call.1} parent=75 // pred_check_branch
          %2009 = sbr.rel (%p2007) target = $region80
        $region79: #{tpu_custom_call.1} parent=75 // pred_region
          %s2011 = ssub.s32 256, 256
          %2012 = vsyncadd %s2003, %s2011
          %s2013 = smul.addr %s28, 2
          %s2014 = smul.addr %s2013, 128
          %s2015 = scalar_lea.hbm %s14, %s2014
          %s2017 = sshll.u32 %s2006, 4
          %s2018 = int_to_ptr.vmem [resolvable:$true] %s2017
          %2020 = dma.vmem_to_hbm [thread:$0]  %s2018, 256, %s2015, %s2003
        $region80: #{tpu_custom_call.1} parent=75 // pred_fallthru
          _
      $region76: #{tpu_custom_call.1} parent=5 // pred_fallthru
        _
      %p2021 = scmp.le.s32.totalorder 2, %s23
      // Predicated region
      $region81: #{tpu_custom_call.1} parent=5 // pred_check
        %p2022 = pneg %p2021
      $region82: #{tpu_custom_call.1} parent=5 // pred_check_branch
        %2024 = sbr.rel (%p2022) target = $region84
      $region83: #{tpu_custom_call.1} parent=5 // pred_region
        %s2025 = ssub.s32 %s23, 2
        // Predicated region
        $region85: #{tpu_custom_call.1} parent=83 // pred_check
          %p2026 = pneg %p351
        $region86: #{tpu_custom_call.1} parent=83 // pred_check_branch
          %2028 = sbr.rel (%p2026) target = $region88
        $region87: #{tpu_custom_call.1} parent=83 // pred_region
          %s2029 = sand.u32 %s336, 1
          %s2030 = scalar_lea.sflag [#allocation3], %s2029
          %s2031 = sand.u32 %s336, 1
          %s2032 = smul.addr %s2031, 16
          %s2033 = scalar_lea.vmem [#allocation2], %s2032
          %2034 = dma.done %s2030, 256
        $region88: #{tpu_custom_call.1} parent=83 // pred_fallthru
          _
      $region84: #{tpu_custom_call.1} parent=5 // pred_fallthru
        _
    $region6: #{tpu_custom_call.1} parent=1 // loop_footer
      %s27 = sadd.s32 1, %s23
    $region7: #{tpu_custom_call.1} parent=1 // loop_footer_branch
      %22 = sbr.rel target = $region3
    $region8: #{tpu_custom_call.1} parent=1 // loop_exit
      _
    %2035 = vsyncpa [#allocation3], 1
    %s2036 = scalar_lea.sflag [#allocation3], 1
    %2037 = vsyncpa %s2036, 1

</llo_original>
